<compile_context>
chip_gen: v5e
topology: v5e:2x2
jax: 0.10.0
libtpu: 0.0.40
codegen_flags: <defaults>
</compile_context>

<pallas_src>
import jax
import jax.numpy as jnp
from jax import lax
from jax.experimental import pallas as pl
from jax.experimental.pallas import tpu as pltpu


def _round_up(x, m):
    return ((x + m - 1) // m) * m


def _largest_divisor_leq(n, cap):
    cap = max(1, min(n, cap))
    for d in range(cap, 0, -1):
        if n % d == 0:
            return d
    return 1


def rnn_chunk_kernel(emb_ref, w_ih_ref, w_hh_ref, b_h_ref, w_fc_ref, b_fc_ref,
                     out_ref, xw_ref, h_ref):
    """One (batch-tile, seq-chunk) grid step of the fused RNN + final Linear.

    emb_ref : (Tc, tB, Hp) time-major embedded inputs for this chunk (mm dtype)
    w_ih_ref: (Hp, Hp)     input->hidden  (transposed, mm dtype)
    w_hh_ref: (Hp, Hp)     hidden->hidden (transposed, mm dtype)
    b_h_ref : (1, Hp)      b_ih + b_hh (f32)
    w_fc_ref: (Hp, Op)     fc weight (transposed, mm dtype)
    b_fc_ref: (1, Op)      fc bias (f32)
    out_ref : (tB, Op)     written only on the last seq-chunk
    xw_ref  : (Tc, tB, Hp) VMEM scratch: hoisted input projection (mm dtype)
    h_ref   : (tB, Hp)     VMEM scratch: hidden state, persists across chunks
    """
    Tc, tB, Hp = emb_ref.shape
    t_idx = pl.program_id(1)
    n_t = pl.num_programs(1)

    @pl.when(t_idx == 0)
    def _():
        h_ref[...] = jnp.zeros_like(h_ref)

    # (1) Hoisted input projection for this chunk: one large (Tc*tB, Hp) x
    #     (Hp, Hp) MXU matmul (independent of the recurrence), bias added once,
    #     stored in the matmul dtype (bf16 on the bf16 path).
    x_all = emb_ref[...].reshape(Tc * tB, Hp)
    xw = jnp.dot(x_all, w_ih_ref[...], preferred_element_type=jnp.float32)
    xw = xw + b_h_ref[...]
    xw_ref[...] = xw.reshape(Tc, tB, Hp).astype(xw_ref.dtype)

    # (2) Serial recurrence: per step only  h @ W_hh + xw[s]  and tanh (EUP).
    #     h is carried in the matmul dtype -> no cast on the critical path;
    #     accumulation stays f32.
    w_hh = w_hh_ref[...]
    unroll = _largest_divisor_leq(Tc, 8)      # trace-time; Tc % unroll == 0

    def step(s, h):
        pre = xw_ref[s].astype(jnp.float32) + jnp.dot(
            h, w_hh, preferred_element_type=jnp.float32)
        return jnp.tanh(pre).astype(h_ref.dtype)

    h_ref[...] = lax.fori_loop(0, Tc, step, h_ref[...], unroll=unroll)

    # (3) Final Linear on the last chunk only; Op is lane-dense (mult. of 128)
    #     so the store is an unmasked vst.
    @pl.when(t_idx == n_t - 1)
    def _():
        out = (jnp.dot(h_ref[...], w_fc_ref[...],
                       preferred_element_type=jnp.float32) + b_fc_ref[...])
        out_ref[...] = out.astype(out_ref.dtype)


def rnn_model_forward(tokens, params, *, matmul_dtype=jnp.float32,
                      block_b=None, chunk_t=None, chunk_vmem_budget=24 << 20):
    """tokens: (B, T) int32 token ids. Returns (B, output_size) float32."""
    f32 = jnp.float32
    mm = matmul_dtype
    emb_table = params["embedding"]
    V, H = emb_table.shape
    O = params["fc_w"].shape[0]
    B, T = tokens.shape

    Hp = _round_up(H, 128)                       # lane-dense hidden
    Op = _round_up(O, 128)                       # lane-dense output

    # ---- batch tiling: cap tB so large batches give >= 2 tiles (DMA overlap +
    # v7x 2-TC sharding); tiny batches just use one padded tile.
    Bp8 = _round_up(B, 8)
    if block_b is None:
        tB = min(256, Bp8)
    else:
        tB = max(8, _round_up(block_b, 8))
    Bp = _round_up(Bp8, tB)

    bytes_mm = jnp.dtype(mm).itemsize

    # ---- seq chunking: Tc must DIVIDE T (zero-padded timesteps would corrupt
    # h); sized so 2x emb chunk (double buffer) + xw scratch fit the budget.
    if chunk_t is None:
        per_step = 3 * tB * Hp * bytes_mm
        tc_cap = min(64, max(1, chunk_vmem_budget // per_step))
        Tc = _largest_divisor_leq(T, tc_cap)
    else:
        Tc = _largest_divisor_leq(T, chunk_t)

    # ---- weights: zero-padding keeps padded hidden lanes exactly 0 through
    # every timestep (tanh(0)=0); padded batch rows / output lanes sliced off.
    w_ih = jnp.zeros((Hp, Hp), f32).at[:H, :H].set(params["w_ih"].T.astype(f32))
    w_hh = jnp.zeros((Hp, Hp), f32).at[:H, :H].set(params["w_hh"].T.astype(f32))
    b_h = jnp.zeros((1, Hp), f32).at[:, :H].set(
        (params["b_ih"] + params["b_hh"]).astype(f32).reshape(1, H))
    w_fc = jnp.zeros((Hp, Op), f32).at[:H, :O].set(params["fc_w"].T.astype(f32))
    b_fc = jnp.zeros((1, Op), f32).at[:, :O].set(
        params["fc_b"].astype(f32).reshape(1, O))
    w_ih, w_hh, w_fc = (w.astype(mm) for w in (w_ih, w_hh, w_fc))

    # ---- embedding gather (plain-JAX glue): ONE gather from the unpadded
    # table (cast in the same op), gathered directly TIME-MAJOR, ONE pad.
    # TODO(synk): for large T*B*H fuse the gather into the kernel via
    # PrefetchScalarGridSpec(token ids) + per-row DMA from the HBM table.
    emb_tm = jnp.take(emb_table.astype(mm), tokens.T, axis=0)       # (T, B, H)
    emb_tm = jnp.pad(emb_tm, ((0, 0), (0, Bp - B), (0, Hp - H)))    # (T,Bp,Hp)

    grid = (Bp // tB, T // Tc)

    def _vmem_limit(weight_bufs):
        emb_b = 2 * Tc * tB * Hp * bytes_mm                  # double-buffered
        scr_b = (Tc * tB * Hp + tB * Hp) * bytes_mm          # xw + h scratch
        w_b = weight_bufs * ((2 * Hp * Hp + Hp * Op) * bytes_mm + (Hp + Op) * 4)
        out_b = 2 * tB * Op * 4
        total = emb_b + scr_b + w_b + out_b
        return int(min(64 << 20, max(16 << 20, int(total * 1.5))))

    def _call(single_buffer_weights):
        w_kw = ({"pipeline_mode": pl.Buffered(1)}
                if single_buffer_weights else {})
        in_specs = [
            # emb chunk per (batch tile, seq chunk): double-buffered DMA
            pl.BlockSpec((Tc, tB, Hp), lambda i, t: (t, i, 0)),
            # weights / biases stay VMEM-resident across the whole grid
            pl.BlockSpec((Hp, Hp), lambda i, t: (0, 0), **w_kw),
            pl.BlockSpec((Hp, Hp), lambda i, t: (0, 0), **w_kw),
            pl.BlockSpec((1, Hp), lambda i, t: (0, 0), **w_kw),
            pl.BlockSpec((Hp, Op), lambda i, t: (0, 0), **w_kw),
            pl.BlockSpec((1, Op), lambda i, t: (0, 0), **w_kw),
        ]
        return pl.pallas_call(
            rnn_chunk_kernel,
            out_shape=jax.ShapeDtypeStruct((Bp, Op), f32),
            grid_spec=pltpu.PrefetchScalarGridSpec(
                num_scalar_prefetch=0,
                grid=grid,
                in_specs=in_specs,
                # constant block index over t -> resident output accumulator
                out_specs=pl.BlockSpec((tB, Op), lambda i, t: (i, 0)),
                scratch_shapes=[pltpu.VMEM((Tc, tB, Hp), mm),   # xw chunk
                                pltpu.VMEM((tB, Hp), mm)],      # hidden state
            ),
            compiler_params=pltpu.CompilerParams(
                dimension_semantics=("parallel", "arbitrary"),
                vmem_limit_bytes=_vmem_limit(1 if single_buffer_weights else 2),
            ),
        )(emb_tm, w_ih, w_hh, b_h, w_fc, b_fc)

    try:
        out = jax.block_until_ready(_call(True))
    except Exception:
        # Fallback for jax versions that reject pipeline_mode=pl.Buffered(1);
        # identical semantics, weights just double-buffered.
        out = _call(False)

    return out[:B, :O]


def init_params(key, input_size, hidden_size, output_size):
    """Deterministic synthetic parameters, PyTorch-native shapes."""
    ks = jax.random.split(key, 7)
    s = 0.1
    return {
        "embedding": s * jax.random.normal(ks[0], (input_size, hidden_size), jnp.float32),
        "w_ih":      s * jax.random.normal(ks[1], (hidden_size, hidden_size), jnp.float32),
        "w_hh":      s * jax.random.normal(ks[2], (hidden_size, hidden_size), jnp.float32),
        "b_ih":      s * jax.random.normal(ks[3], (hidden_size,), jnp.float32),
        "b_hh":      s * jax.random.normal(ks[4], (hidden_size,), jnp.float32),
        "fc_w":      s * jax.random.normal(ks[5], (output_size, hidden_size), jnp.float32),
        "fc_b":      s * jax.random.normal(ks[6], (output_size,), jnp.float32),
    }


def reference_forward(tokens, params):
    """Pure-JAX reference matching PyTorch RNNModel.forward semantics."""
    emb = jnp.take(params["embedding"], tokens, axis=0)   # (B, T, H)
    B, T, H = emb.shape
    h = jnp.zeros((B, H), jnp.float32)
    for t in range(T):
        h = jnp.tanh(emb[:, t, :] @ params["w_ih"].T + params["b_ih"]
                     + h @ params["w_hh"].T + params["b_hh"])
    return h @ params["fc_w"].T + params["fc_b"]


if __name__ == "__main__":
    input_size = 50     # vocab size
    hidden_size = 32
    output_size = 10
    batch = 2
    seq_len = 8

    key = jax.random.PRNGKey(0)
    k_tok, k_param, k_tok2 = jax.random.split(key, 3)

    tokens = jax.random.randint(k_tok, (batch, seq_len), 0, input_size, dtype=jnp.int32)
    params = init_params(k_param, input_size, hidden_size, output_size)
    ref = reference_forward(tokens, params)

    # Exact-dtype path (f32 matmul inputs, f32 accumulation / f32 h).
    out = rnn_model_forward(tokens, params, matmul_dtype=jnp.float32)
    out = jax.block_until_ready(out)
    assert out.shape == (batch, output_size)
    assert jnp.allclose(out, ref, atol=1e-5, rtol=1e-5), "f32 mismatch vs reference"

    # bf16 matmul-input path (bf16 xw/h carry, f32 accumulation) — looser tol.
    out_bf16 = rnn_model_forward(tokens, params, matmul_dtype=jnp.bfloat16)
    out_bf16 = jax.block_until_ready(out_bf16)
    assert jnp.allclose(out_bf16, ref, atol=3e-2, rtol=3e-2), "bf16 mismatch vs reference"

    # Multi-tile sanity check: 2 batch tiles x 3 seq chunks exercises the
    # persistent-h / pl.when(t==0) / pl.when(t==last) pipeline structure.
    tokens2 = jax.random.randint(k_tok2, (16, 12), 0, input_size, dtype=jnp.int32)
    ref2 = reference_forward(tokens2, params)
    out2 = rnn_model_forward(tokens2, params, matmul_dtype=jnp.float32,
                             block_b=8, chunk_t=4)
    out2 = jax.block_until_ready(out2)
    assert jnp.allclose(out2, ref2, atol=1e-5, rtol=1e-5), "multi-tile mismatch"

    print("KERNEL_OK")
</pallas_src>

<mosaic_0001>
module attributes {stable_mosaic.version = 11 : i64} {
  func.func @rnn_chunk_kernel(%arg0: i32, %arg1: i32, %arg2: memref<8x8x128xf32, #tpu.memory_space<vmem>>, %arg3: memref<128x128xf32, #tpu.memory_space<vmem>>, %arg4: memref<128x128xf32, #tpu.memory_space<vmem>>, %arg5: memref<1x128xf32, #tpu.memory_space<vmem>>, %arg6: memref<128x128xf32, #tpu.memory_space<vmem>>, %arg7: memref<1x128xf32, #tpu.memory_space<vmem>>, %arg8: memref<8x128xf32, #tpu.memory_space<vmem>>, %arg9: memref<8x8x128xf32, #tpu.memory_space<vmem>>, %arg10: memref<8x128xf32, #tpu.memory_space<vmem>>) attributes {dimension_semantics = [#tpu.dimension_semantics<parallel>, #tpu.dimension_semantics<arbitrary>], iteration_bounds = array<i64: 1, 1>, scalar_prefetch = 0 : i64, scratch_operands = 2 : i64, tpu.core_type = #tpu.core_type<tc>, window_params = [{transform_indices = @transform_0, window_bounds = array<i64: 8, 8, 128>}, {pipeline_mode = #tpu.pipeline_mode<synchronous>, transform_indices = @transform_1, window_bounds = array<i64: 128, 128>}, {pipeline_mode = #tpu.pipeline_mode<synchronous>, transform_indices = @transform_2, window_bounds = array<i64: 128, 128>}, {pipeline_mode = #tpu.pipeline_mode<synchronous>, transform_indices = @transform_3, window_bounds = array<i64: 1, 128>}, {pipeline_mode = #tpu.pipeline_mode<synchronous>, transform_indices = @transform_4, window_bounds = array<i64: 128, 128>}, {pipeline_mode = #tpu.pipeline_mode<synchronous>, transform_indices = @transform_5, window_bounds = array<i64: 1, 128>}, {transform_indices = @transform_6, window_bounds = array<i64: 8, 128>}]} {
    %c0_i32 = arith.constant 0 : i32
    %0 = arith.cmpi eq, %arg1, %c0_i32 : i32
    %1 = arith.extui %0 : i1 to i32
    %c0_i32_0 = arith.constant 0 : i32
    %2 = arith.cmpi ne, %1, %c0_i32_0 : i32
    scf.if %2 {
      %cst_43 = arith.constant 0.000000e+00 : f32
      %66 = vector.broadcast %cst_43 : f32 to vector<8x128xf32>
      %c0_44 = arith.constant 0 : index
      %c0_45 = arith.constant 0 : index
      %67 = vector.load %arg10[%c0_44, %c0_45] : memref<8x128xf32, #tpu.memory_space<vmem>>, vector<8x128xf32>
      tpu.vector_store %arg10[%c0_44, %c0_45], %66 {strides = array<i32>} : memref<8x128xf32, #tpu.memory_space<vmem>>, vector<8x128xf32>,
    } else {
    }
    %c0 = arith.constant 0 : index
    %c0_1 = arith.constant 0 : index
    %c0_2 = arith.constant 0 : index
    %3 = vector.load %arg2[%c0, %c0_1, %c0_2] : memref<8x8x128xf32, #tpu.memory_space<vmem>>, vector<8x8x128xf32>
    %4 = vector.shape_cast %3 : vector<8x8x128xf32> to vector<64x128xf32>
    %c0_3 = arith.constant 0 : index
    %c0_4 = arith.constant 0 : index
    %5 = vector.load %arg3[%c0_3, %c0_4] : memref<128x128xf32, #tpu.memory_space<vmem>>, vector<128x128xf32>
    %cst = arith.constant dense<0.000000e+00> : vector<64x128xf32>
    %6 = tpu.matmul %4, %5, %cst {dimension_numbers = #tpu.dot_dimension_numbers<[1], [0], [0], [1], [0, 0, 1, 1], [], []>} : vector<64x128xf32>, vector<128x128xf32>, vector<64x128xf32> -> vector<64x128xf32>
    %c0_5 = arith.constant 0 : index
    %c0_6 = arith.constant 0 : index
    %7 = vector.load %arg5[%c0_5, %c0_6] : memref<1x128xf32, #tpu.memory_space<vmem>>, vector<1x128xf32>
    %8 = vector.broadcast %7 : vector<1x128xf32> to vector<64x128xf32>
    %9 = arith.addf %6, %8 : vector<64x128xf32>
    %10 = vector.shape_cast %9 : vector<64x128xf32> to vector<8x8x128xf32>
    %c0_7 = arith.constant 0 : index
    %c0_8 = arith.constant 0 : index
    %c0_9 = arith.constant 0 : index
    %11 = vector.load %arg9[%c0_7, %c0_8, %c0_9] : memref<8x8x128xf32, #tpu.memory_space<vmem>>, vector<8x8x128xf32>
    tpu.vector_store %arg9[%c0_7, %c0_8, %c0_9], %10 {strides = array<i32>} : memref<8x8x128xf32, #tpu.memory_space<vmem>>, vector<8x8x128xf32>,
    %c0_10 = arith.constant 0 : index
    %c0_11 = arith.constant 0 : index
    %12 = vector.load %arg4[%c0_10, %c0_11] : memref<128x128xf32, #tpu.memory_space<vmem>>, vector<128x128xf32>
    %c0_12 = arith.constant 0 : index
    %c0_13 = arith.constant 0 : index
    %13 = vector.load %arg10[%c0_12, %c0_13] : memref<8x128xf32, #tpu.memory_space<vmem>>, vector<8x128xf32>
    %c0_i32_14 = arith.constant 0 : i32
    %14 = arith.index_cast %c0_i32_14 : i32 to index
    %c0_15 = arith.constant 0 : index
    %c0_16 = arith.constant 0 : index
    %15 = vector.load %arg9[%14, %c0_15, %c0_16] : memref<8x8x128xf32, #tpu.memory_space<vmem>>, vector<1x8x128xf32>
    %16 = vector.shape_cast %15 : vector<1x8x128xf32> to vector<8x128xf32>
    %cst_17 = arith.constant dense<0.000000e+00> : vector<8x128xf32>
    %17 = tpu.matmul %13, %12, %cst_17 {dimension_numbers = #tpu.dot_dimension_numbers<[1], [0], [0], [1], [0, 0, 1, 1], [], []>} : vector<8x128xf32>, vector<128x128xf32>, vector<8x128xf32> -> vector<8x128xf32>
    %18 = arith.addf %16, %17 : vector<8x128xf32>
    %19 = math.tanh %18 : vector<8x128xf32>
    %c1_i32 = arith.constant 1 : i32
    %20 = arith.index_cast %c1_i32 : i32 to index
    %c0_18 = arith.constant 0 : index
    %c0_19 = arith.constant 0 : index
    %21 = vector.load %arg9[%20, %c0_18, %c0_19] : memref<8x8x128xf32, #tpu.memory_space<vmem>>, vector<1x8x128xf32>
    %22 = vector.shape_cast %21 : vector<1x8x128xf32> to vector<8x128xf32>
    %cst_20 = arith.constant dense<0.000000e+00> : vector<8x128xf32>
    %23 = tpu.matmul %19, %12, %cst_20 {dimension_numbers = #tpu.dot_dimension_numbers<[1], [0], [0], [1], [0, 0, 1, 1], [], []>} : vector<8x128xf32>, vector<128x128xf32>, vector<8x128xf32> -> vector<8x128xf32>
    %24 = arith.addf %22, %23 : vector<8x128xf32>
    %25 = math.tanh %24 : vector<8x128xf32>
    %c2_i32 = arith.constant 2 : i32
    %26 = arith.index_cast %c2_i32 : i32 to index
    %c0_21 = arith.constant 0 : index
    %c0_22 = arith.constant 0 : index
    %27 = vector.load %arg9[%26, %c0_21, %c0_22] : memref<8x8x128xf32, #tpu.memory_space<vmem>>, vector<1x8x128xf32>
    %28 = vector.shape_cast %27 : vector<1x8x128xf32> to vector<8x128xf32>
    %cst_23 = arith.constant dense<0.000000e+00> : vector<8x128xf32>
    %29 = tpu.matmul %25, %12, %cst_23 {dimension_numbers = #tpu.dot_dimension_numbers<[1], [0], [0], [1], [0, 0, 1, 1], [], []>} : vector<8x128xf32>, vector<128x128xf32>, vector<8x128xf32> -> vector<8x128xf32>
    %30 = arith.addf %28, %29 : vector<8x128xf32>
    %31 = math.tanh %30 : vector<8x128xf32>
    %c3_i32 = arith.constant 3 : i32
    %32 = arith.index_cast %c3_i32 : i32 to index
    %c0_24 = arith.constant 0 : index
    %c0_25 = arith.constant 0 : index
    %33 = vector.load %arg9[%32, %c0_24, %c0_25] : memref<8x8x128xf32, #tpu.memory_space<vmem>>, vector<1x8x128xf32>
    %34 = vector.shape_cast %33 : vector<1x8x128xf32> to vector<8x128xf32>
    %cst_26 = arith.constant dense<0.000000e+00> : vector<8x128xf32>
    %35 = tpu.matmul %31, %12, %cst_26 {dimension_numbers = #tpu.dot_dimension_numbers<[1], [0], [0], [1], [0, 0, 1, 1], [], []>} : vector<8x128xf32>, vector<128x128xf32>, vector<8x128xf32> -> vector<8x128xf32>
    %36 = arith.addf %34, %35 : vector<8x128xf32>
    %37 = math.tanh %36 : vector<8x128xf32>
    %c4_i32 = arith.constant 4 : i32
    %38 = arith.index_cast %c4_i32 : i32 to index
    %c0_27 = arith.constant 0 : index
    %c0_28 = arith.constant 0 : index
    %39 = vector.load %arg9[%38, %c0_27, %c0_28] : memref<8x8x128xf32, #tpu.memory_space<vmem>>, vector<1x8x128xf32>
    %40 = vector.shape_cast %39 : vector<1x8x128xf32> to vector<8x128xf32>
    %cst_29 = arith.constant dense<0.000000e+00> : vector<8x128xf32>
    %41 = tpu.matmul %37, %12, %cst_29 {dimension_numbers = #tpu.dot_dimension_numbers<[1], [0], [0], [1], [0, 0, 1, 1], [], []>} : vector<8x128xf32>, vector<128x128xf32>, vector<8x128xf32> -> vector<8x128xf32>
    %42 = arith.addf %40, %41 : vector<8x128xf32>
    %43 = math.tanh %42 : vector<8x128xf32>
    %c5_i32 = arith.constant 5 : i32
    %44 = arith.index_cast %c5_i32 : i32 to index
    %c0_30 = arith.constant 0 : index
    %c0_31 = arith.constant 0 : index
    %45 = vector.load %arg9[%44, %c0_30, %c0_31] : memref<8x8x128xf32, #tpu.memory_space<vmem>>, vector<1x8x128xf32>
    %46 = vector.shape_cast %45 : vector<1x8x128xf32> to vector<8x128xf32>
    %cst_32 = arith.constant dense<0.000000e+00> : vector<8x128xf32>
    %47 = tpu.matmul %43, %12, %cst_32 {dimension_numbers = #tpu.dot_dimension_numbers<[1], [0], [0], [1], [0, 0, 1, 1], [], []>} : vector<8x128xf32>, vector<128x128xf32>, vector<8x128xf32> -> vector<8x128xf32>
    %48 = arith.addf %46, %47 : vector<8x128xf32>
    %49 = math.tanh %48 : vector<8x128xf32>
    %c6_i32 = arith.constant 6 : i32
    %50 = arith.index_cast %c6_i32 : i32 to index
    %c0_33 = arith.constant 0 : index
    %c0_34 = arith.constant 0 : index
    %51 = vector.load %arg9[%50, %c0_33, %c0_34] : memref<8x8x128xf32, #tpu.memory_space<vmem>>, vector<1x8x128xf32>
    %52 = vector.shape_cast %51 : vector<1x8x128xf32> to vector<8x128xf32>
    %cst_35 = arith.constant dense<0.000000e+00> : vector<8x128xf32>
    %53 = tpu.matmul %49, %12, %cst_35 {dimension_numbers = #tpu.dot_dimension_numbers<[1], [0], [0], [1], [0, 0, 1, 1], [], []>} : vector<8x128xf32>, vector<128x128xf32>, vector<8x128xf32> -> vector<8x128xf32>
    %54 = arith.addf %52, %53 : vector<8x128xf32>
    %55 = math.tanh %54 : vector<8x128xf32>
    %c7_i32 = arith.constant 7 : i32
    %56 = arith.index_cast %c7_i32 : i32 to index
    %c0_36 = arith.constant 0 : index
    %c0_37 = arith.constant 0 : index
    %57 = vector.load %arg9[%56, %c0_36, %c0_37] : memref<8x8x128xf32, #tpu.memory_space<vmem>>, vector<1x8x128xf32>
    %58 = vector.shape_cast %57 : vector<1x8x128xf32> to vector<8x128xf32>
    %cst_38 = arith.constant dense<0.000000e+00> : vector<8x128xf32>
    %59 = tpu.matmul %55, %12, %cst_38 {dimension_numbers = #tpu.dot_dimension_numbers<[1], [0], [0], [1], [0, 0, 1, 1], [], []>} : vector<8x128xf32>, vector<128x128xf32>, vector<8x128xf32> -> vector<8x128xf32>
    %60 = arith.addf %58, %59 : vector<8x128xf32>
    %61 = math.tanh %60 : vector<8x128xf32>
    %c8_i32 = arith.constant 8 : i32
    %c0_39 = arith.constant 0 : index
    %c0_40 = arith.constant 0 : index
    %62 = vector.load %arg10[%c0_39, %c0_40] : memref<8x128xf32, #tpu.memory_space<vmem>>, vector<8x128xf32>
    tpu.vector_store %arg10[%c0_39, %c0_40], %61 {strides = array<i32>} : memref<8x128xf32, #tpu.memory_space<vmem>>, vector<8x128xf32>,
    %c0_i32_41 = arith.constant 0 : i32
    %63 = arith.cmpi eq, %arg1, %c0_i32_41 : i32
    %64 = arith.extui %63 : i1 to i32
    %c0_i32_42 = arith.constant 0 : i32
    %65 = arith.cmpi ne, %64, %c0_i32_42 : i32
    scf.if %65 {
      %c0_43 = arith.constant 0 : index
      %c0_44 = arith.constant 0 : index
      %66 = vector.load %arg10[%c0_43, %c0_44] : memref<8x128xf32, #tpu.memory_space<vmem>>, vector<8x128xf32>
      %c0_45 = arith.constant 0 : index
      %c0_46 = arith.constant 0 : index
      %67 = vector.load %arg6[%c0_45, %c0_46] : memref<128x128xf32, #tpu.memory_space<vmem>>, vector<128x128xf32>
      %cst_47 = arith.constant dense<0.000000e+00> : vector<8x128xf32>
      %68 = tpu.matmul %66, %67, %cst_47 {dimension_numbers = #tpu.dot_dimension_numbers<[1], [0], [0], [1], [0, 0, 1, 1], [], []>} : vector<8x128xf32>, vector<128x128xf32>, vector<8x128xf32> -> vector<8x128xf32>
      %c0_48 = arith.constant 0 : index
      %c0_49 = arith.constant 0 : index
      %69 = vector.load %arg7[%c0_48, %c0_49] : memref<1x128xf32, #tpu.memory_space<vmem>>, vector<1x128xf32>
      %70 = vector.broadcast %69 : vector<1x128xf32> to vector<8x128xf32>
      %71 = arith.addf %68, %70 : vector<8x128xf32>
      %c0_50 = arith.constant 0 : index
      %c0_51 = arith.constant 0 : index
      %72 = vector.load %arg8[%c0_50, %c0_51] : memref<8x128xf32, #tpu.memory_space<vmem>>, vector<8x128xf32>
      tpu.vector_store %arg8[%c0_50, %c0_51], %71 {strides = array<i32>} : memref<8x128xf32, #tpu.memory_space<vmem>>, vector<8x128xf32>,
    } else {
    }
    return
  }
  func.func @transform_0(%arg0: i32, %arg1: i32) -> (i32, i32, i32) {
    %c0_i32 = arith.constant 0 : i32
    %c0_i32_0 = arith.constant 0 : i32
    return %arg1, %arg0, %c0_i32 : i32, i32, i32
  }
  func.func @transform_1(%arg0: i32, %arg1: i32) -> (i32, i32) {
    %c0_i32 = arith.constant 0 : i32
    %c0_i32_0 = arith.constant 0 : i32
    %c0_i32_1 = arith.constant 0 : i32
    return %c0_i32, %c0_i32_0 : i32, i32
  }
  func.func @transform_2(%arg0: i32, %arg1: i32) -> (i32, i32) {
    %c0_i32 = arith.constant 0 : i32
    %c0_i32_0 = arith.constant 0 : i32
    %c0_i32_1 = arith.constant 0 : i32
    return %c0_i32, %c0_i32_0 : i32, i32
  }
  func.func @transform_3(%arg0: i32, %arg1: i32) -> (i32, i32) {
    %c0_i32 = arith.constant 0 : i32
    %c0_i32_0 = arith.constant 0 : i32
    %c0_i32_1 = arith.constant 0 : i32
    return %c0_i32, %c0_i32_0 : i32, i32
  }
  func.func @transform_4(%arg0: i32, %arg1: i32) -> (i32, i32) {
    %c0_i32 = arith.constant 0 : i32
    %c0_i32_0 = arith.constant 0 : i32
    %c0_i32_1 = arith.constant 0 : i32
    return %c0_i32, %c0_i32_0 : i32, i32
  }
  func.func @transform_5(%arg0: i32, %arg1: i32) -> (i32, i32) {
    %c0_i32 = arith.constant 0 : i32
    %c0_i32_0 = arith.constant 0 : i32
    %c0_i32_1 = arith.constant 0 : i32
    return %c0_i32, %c0_i32_0 : i32, i32
  }
  func.func @transform_6(%arg0: i32, %arg1: i32) -> (i32, i32) {
    %c0_i32 = arith.constant 0 : i32
    %c0_i32_0 = arith.constant 0 : i32
    return %arg0, %c0_i32 : i32, i32
  }
}

module attributes {stable_mosaic.version = 11 : i64} {
  func.func @rnn_chunk_kernel(%arg0: i32, %arg1: i32, %arg2: memref<8x8x128xf32, #tpu.memory_space<vmem>>, %arg3: memref<128x128xf32, #tpu.memory_space<vmem>>, %arg4: memref<128x128xf32, #tpu.memory_space<vmem>>, %arg5: memref<1x128xf32, #tpu.memory_space<vmem>>, %arg6: memref<128x128xf32, #tpu.memory_space<vmem>>, %arg7: memref<1x128xf32, #tpu.memory_space<vmem>>, %arg8: memref<8x128xf32, #tpu.memory_space<vmem>>, %arg9: memref<8x8x128xf32, #tpu.memory_space<vmem>>, %arg10: memref<8x128xf32, #tpu.memory_space<vmem>>) attributes {dimension_semantics = [#tpu.dimension_semantics<parallel>, #tpu.dimension_semantics<arbitrary>], iteration_bounds = array<i64: 1, 1>, scalar_prefetch = 0 : i64, scratch_operands = 2 : i64, tpu.core_type = #tpu.core_type<tc>, window_params = [{transform_indices = @transform_0, window_bounds = array<i64: 8, 8, 128>}, {pipeline_mode = #tpu.pipeline_mode<synchronous>, transform_indices = @transform_1, window_bounds = array<i64: 128, 128>}, {pipeline_mode = #tpu.pipeline_mode<synchronous>, transform_indices = @transform_2, window_bounds = array<i64: 128, 128>}, {pipeline_mode = #tpu.pipeline_mode<synchronous>, transform_indices = @transform_3, window_bounds = array<i64: 1, 128>}, {pipeline_mode = #tpu.pipeline_mode<synchronous>, transform_indices = @transform_4, window_bounds = array<i64: 128, 128>}, {pipeline_mode = #tpu.pipeline_mode<synchronous>, transform_indices = @transform_5, window_bounds = array<i64: 1, 128>}, {transform_indices = @transform_6, window_bounds = array<i64: 8, 128>}]} {
    %c0_i32 = arith.constant 0 : i32
    %0 = arith.cmpi eq, %arg1, %c0_i32 : i32
    %1 = arith.extui %0 : i1 to i32
    %c0_i32_0 = arith.constant 0 : i32
    %2 = arith.cmpi ne, %1, %c0_i32_0 : i32
    scf.if %2 {
      %cst_43 = arith.constant 0.000000e+00 : f32
      %66 = vector.broadcast %cst_43 : f32 to vector<8x128xf32>
      %c0_44 = arith.constant 0 : index
      %c0_45 = arith.constant 0 : index
      %67 = vector.load %arg10[%c0_44, %c0_45] : memref<8x128xf32, #tpu.memory_space<vmem>>, vector<8x128xf32>
      tpu.vector_store %arg10[%c0_44, %c0_45], %66 {strides = array<i32>} : memref<8x128xf32, #tpu.memory_space<vmem>>, vector<8x128xf32>,
    } else {
    }
    %c0 = arith.constant 0 : index
    %c0_1 = arith.constant 0 : index
    %c0_2 = arith.constant 0 : index
    %3 = vector.load %arg2[%c0, %c0_1, %c0_2] : memref<8x8x128xf32, #tpu.memory_space<vmem>>, vector<8x8x128xf32>
    %4 = vector.shape_cast %3 : vector<8x8x128xf32> to vector<64x128xf32>
    %c0_3 = arith.constant 0 : index
    %c0_4 = arith.constant 0 : index
    %5 = vector.load %arg3[%c0_3, %c0_4] : memref<128x128xf32, #tpu.memory_space<vmem>>, vector<128x128xf32>
    %cst = arith.constant dense<0.000000e+00> : vector<64x128xf32>
    %6 = tpu.matmul %4, %5, %cst {dimension_numbers = #tpu.dot_dimension_numbers<[1], [0], [0], [1], [0, 0, 1, 1], [], []>} : vector<64x128xf32>, vector<128x128xf32>, vector<64x128xf32> -> vector<64x128xf32>
    %c0_5 = arith.constant 0 : index
    %c0_6 = arith.constant 0 : index
    %7 = vector.load %arg5[%c0_5, %c0_6] : memref<1x128xf32, #tpu.memory_space<vmem>>, vector<1x128xf32>
    %8 = vector.broadcast %7 : vector<1x128xf32> to vector<64x128xf32>
    %9 = arith.addf %6, %8 : vector<64x128xf32>
    %10 = vector.shape_cast %9 : vector<64x128xf32> to vector<8x8x128xf32>
    %c0_7 = arith.constant 0 : index
    %c0_8 = arith.constant 0 : index
    %c0_9 = arith.constant 0 : index
    %11 = vector.load %arg9[%c0_7, %c0_8, %c0_9] : memref<8x8x128xf32, #tpu.memory_space<vmem>>, vector<8x8x128xf32>
    tpu.vector_store %arg9[%c0_7, %c0_8, %c0_9], %10 {strides = array<i32>} : memref<8x8x128xf32, #tpu.memory_space<vmem>>, vector<8x8x128xf32>,
    %c0_10 = arith.constant 0 : index
    %c0_11 = arith.constant 0 : index
    %12 = vector.load %arg4[%c0_10, %c0_11] : memref<128x128xf32, #tpu.memory_space<vmem>>, vector<128x128xf32>
    %c0_12 = arith.constant 0 : index
    %c0_13 = arith.constant 0 : index
    %13 = vector.load %arg10[%c0_12, %c0_13] : memref<8x128xf32, #tpu.memory_space<vmem>>, vector<8x128xf32>
    %c0_i32_14 = arith.constant 0 : i32
    %14 = arith.index_cast %c0_i32_14 : i32 to index
    %c0_15 = arith.constant 0 : index
    %c0_16 = arith.constant 0 : index
    %15 = vector.load %arg9[%14, %c0_15, %c0_16] : memref<8x8x128xf32, #tpu.memory_space<vmem>>, vector<1x8x128xf32>
    %16 = vector.shape_cast %15 : vector<1x8x128xf32> to vector<8x128xf32>
    %cst_17 = arith.constant dense<0.000000e+00> : vector<8x128xf32>
    %17 = tpu.matmul %13, %12, %cst_17 {dimension_numbers = #tpu.dot_dimension_numbers<[1], [0], [0], [1], [0, 0, 1, 1], [], []>} : vector<8x128xf32>, vector<128x128xf32>, vector<8x128xf32> -> vector<8x128xf32>
    %18 = arith.addf %16, %17 : vector<8x128xf32>
    %19 = math.tanh %18 : vector<8x128xf32>
    %c1_i32 = arith.constant 1 : i32
    %20 = arith.index_cast %c1_i32 : i32 to index
    %c0_18 = arith.constant 0 : index
    %c0_19 = arith.constant 0 : index
    %21 = vector.load %arg9[%20, %c0_18, %c0_19] : memref<8x8x128xf32, #tpu.memory_space<vmem>>, vector<1x8x128xf32>
    %22 = vector.shape_cast %21 : vector<1x8x128xf32> to vector<8x128xf32>
    %cst_20 = arith.constant dense<0.000000e+00> : vector<8x128xf32>
    %23 = tpu.matmul %19, %12, %cst_20 {dimension_numbers = #tpu.dot_dimension_numbers<[1], [0], [0], [1], [0, 0, 1, 1], [], []>} : vector<8x128xf32>, vector<128x128xf32>, vector<8x128xf32> -> vector<8x128xf32>
    %24 = arith.addf %22, %23 : vector<8x128xf32>
    %25 = math.tanh %24 : vector<8x128xf32>
    %c2_i32 = arith.constant 2 : i32
    %26 = arith.index_cast %c2_i32 : i32 to index
    %c0_21 = arith.constant 0 : index
    %c0_22 = arith.constant 0 : index
    %27 = vector.load %arg9[%26, %c0_21, %c0_22] : memref<8x8x128xf32, #tpu.memory_space<vmem>>, vector<1x8x128xf32>
    %28 = vector.shape_cast %27 : vector<1x8x128xf32> to vector<8x128xf32>
    %cst_23 = arith.constant dense<0.000000e+00> : vector<8x128xf32>
    %29 = tpu.matmul %25, %12, %cst_23 {dimension_numbers = #tpu.dot_dimension_numbers<[1], [0], [0], [1], [0, 0, 1, 1], [], []>} : vector<8x128xf32>, vector<128x128xf32>, vector<8x128xf32> -> vector<8x128xf32>
    %30 = arith.addf %28, %29 : vector<8x128xf32>
    %31 = math.tanh %30 : vector<8x128xf32>
    %c3_i32 = arith.constant 3 : i32
    %32 = arith.index_cast %c3_i32 : i32 to index
    %c0_24 = arith.constant 0 : index
    %c0_25 = arith.constant 0 : index
    %33 = vector.load %arg9[%32, %c0_24, %c0_25] : memref<8x8x128xf32, #tpu.memory_space<vmem>>, vector<1x8x128xf32>
    %34 = vector.shape_cast %33 : vector<1x8x128xf32> to vector<8x128xf32>
    %cst_26 = arith.constant dense<0.000000e+00> : vector<8x128xf32>
    %35 = tpu.matmul %31, %12, %cst_26 {dimension_numbers = #tpu.dot_dimension_numbers<[1], [0], [0], [1], [0, 0, 1, 1], [], []>} : vector<8x128xf32>, vector<128x128xf32>, vector<8x128xf32> -> vector<8x128xf32>
    %36 = arith.addf %34, %35 : vector<8x128xf32>
    %37 = math.tanh %36 : vector<8x128xf32>
    %c4_i32 = arith.constant 4 : i32
    %38 = arith.index_cast %c4_i32 : i32 to index
    %c0_27 = arith.constant 0 : index
    %c0_28 = arith.constant 0 : index
    %39 = vector.load %arg9[%38, %c0_27, %c0_28] : memref<8x8x128xf32, #tpu.memory_space<vmem>>, vector<1x8x128xf32>
    %40 = vector.shape_cast %39 : vector<1x8x128xf32> to vector<8x128xf32>
    %cst_29 = arith.constant dense<0.000000e+00> : vector<8x128xf32>
    %41 = tpu.matmul %37, %12, %cst_29 {dimension_numbers = #tpu.dot_dimension_numbers<[1], [0], [0], [1], [0, 0, 1, 1], [], []>} : vector<8x128xf32>, vector<128x128xf32>, vector<8x128xf32> -> vector<8x128xf32>
    %42 = arith.addf %40, %41 : vector<8x128xf32>
    %43 = math.tanh %42 : vector<8x128xf32>
    %c5_i32 = arith.constant 5 : i32
    %44 = arith.index_cast %c5_i32 : i32 to index
    %c0_30 = arith.constant 0 : index
    %c0_31 = arith.constant 0 : index
    %45 = vector.load %arg9[%44, %c0_30, %c0_31] : memref<8x8x128xf32, #tpu.memory_space<vmem>>, vector<1x8x128xf32>
    %46 = vector.shape_cast %45 : vector<1x8x128xf32> to vector<8x128xf32>
    %cst_32 = arith.constant dense<0.000000e+00> : vector<8x128xf32>
    %47 = tpu.matmul %43, %12, %cst_32 {dimension_numbers = #tpu.dot_dimension_numbers<[1], [0], [0], [1], [0, 0, 1, 1], [], []>} : vector<8x128xf32>, vector<128x128xf32>, vector<8x128xf32> -> vector<8x128xf32>
    %48 = arith.addf %46, %47 : vector<8x128xf32>
    %49 = math.tanh %48 : vector<8x128xf32>
    %c6_i32 = arith.constant 6 : i32
    %50 = arith.index_cast %c6_i32 : i32 to index
    %c0_33 = arith.constant 0 : index
    %c0_34 = arith.constant 0 : index
    %51 = vector.load %arg9[%50, %c0_33, %c0_34] : memref<8x8x128xf32, #tpu.memory_space<vmem>>, vector<1x8x128xf32>
    %52 = vector.shape_cast %51 : vector<1x8x128xf32> to vector<8x128xf32>
    %cst_35 = arith.constant dense<0.000000e+00> : vector<8x128xf32>
    %53 = tpu.matmul %49, %12, %cst_35 {dimension_numbers = #tpu.dot_dimension_numbers<[1], [0], [0], [1], [0, 0, 1, 1], [], []>} : vector<8x128xf32>, vector<128x128xf32>, vector<8x128xf32> -> vector<8x128xf32>
    %54 = arith.addf %52, %53 : vector<8x128xf32>
    %55 = math.tanh %54 : vector<8x128xf32>
    %c7_i32 = arith.constant 7 : i32
    %56 = arith.index_cast %c7_i32 : i32 to index
    %c0_36 = arith.constant 0 : index
    %c0_37 = arith.constant 0 : index
    %57 = vector.load %arg9[%56, %c0_36, %c0_37] : memref<8x8x128xf32, #tpu.memory_space<vmem>>, vector<1x8x128xf32>
    %58 = vector.shape_cast %57 : vector<1x8x128xf32> to vector<8x128xf32>
    %cst_38 = arith.constant dense<0.000000e+00> : vector<8x128xf32>
    %59 = tpu.matmul %55, %12, %cst_38 {dimension_numbers = #tpu.dot_dimension_numbers<[1], [0], [0], [1], [0, 0, 1, 1], [], []>} : vector<8x128xf32>, vector<128x128xf32>, vector<8x128xf32> -> vector<8x128xf32>
    %60 = arith.addf %58, %59 : vector<8x128xf32>
    %61 = math.tanh %60 : vector<8x128xf32>
    %c8_i32 = arith.constant 8 : i32
    %c0_39 = arith.constant 0 : index
    %c0_40 = arith.constant 0 : index
    %62 = vector.load %arg10[%c0_39, %c0_40] : memref<8x128xf32, #tpu.memory_space<vmem>>, vector<8x128xf32>
    tpu.vector_store %arg10[%c0_39, %c0_40], %61 {strides = array<i32>} : memref<8x128xf32, #tpu.memory_space<vmem>>, vector<8x128xf32>,
    %c0_i32_41 = arith.constant 0 : i32
    %63 = arith.cmpi eq, %arg1, %c0_i32_41 : i32
    %64 = arith.extui %63 : i1 to i32
    %c0_i32_42 = arith.constant 0 : i32
    %65 = arith.cmpi ne, %64, %c0_i32_42 : i32
    scf.if %65 {
      %c0_43 = arith.constant 0 : index
      %c0_44 = arith.constant 0 : index
      %66 = vector.load %arg10[%c0_43, %c0_44] : memref<8x128xf32, #tpu.memory_space<vmem>>, vector<8x128xf32>
      %c0_45 = arith.constant 0 : index
      %c0_46 = arith.constant 0 : index
      %67 = vector.load %arg6[%c0_45, %c0_46] : memref<128x128xf32, #tpu.memory_space<vmem>>, vector<128x128xf32>
      %cst_47 = arith.constant dense<0.000000e+00> : vector<8x128xf32>
      %68 = tpu.matmul %66, %67, %cst_47 {dimension_numbers = #tpu.dot_dimension_numbers<[1], [0], [0], [1], [0, 0, 1, 1], [], []>} : vector<8x128xf32>, vector<128x128xf32>, vector<8x128xf32> -> vector<8x128xf32>
      %c0_48 = arith.constant 0 : index
      %c0_49 = arith.constant 0 : index
      %69 = vector.load %arg7[%c0_48, %c0_49] : memref<1x128xf32, #tpu.memory_space<vmem>>, vector<1x128xf32>
      %70 = vector.broadcast %69 : vector<1x128xf32> to vector<8x128xf32>
      %71 = arith.addf %68, %70 : vector<8x128xf32>
      %c0_50 = arith.constant 0 : index
      %c0_51 = arith.constant 0 : index
      %72 = vector.load %arg8[%c0_50, %c0_51] : memref<8x128xf32, #tpu.memory_space<vmem>>, vector<8x128xf32>
      tpu.vector_store %arg8[%c0_50, %c0_51], %71 {strides = array<i32>} : memref<8x128xf32, #tpu.memory_space<vmem>>, vector<8x128xf32>,
    } else {
    }
    return
  }
  func.func @transform_0(%arg0: i32, %arg1: i32) -> (i32, i32, i32) {
    %c0_i32 = arith.constant 0 : i32
    %c0_i32_0 = arith.constant 0 : i32
    return %arg1, %arg0, %c0_i32 : i32, i32, i32
  }
  func.func @transform_1(%arg0: i32, %arg1: i32) -> (i32, i32) {
    %c0_i32 = arith.constant 0 : i32
    %c0_i32_0 = arith.constant 0 : i32
    %c0_i32_1 = arith.constant 0 : i32
    return %c0_i32, %c0_i32_0 : i32, i32
  }
  func.func @transform_2(%arg0: i32, %arg1: i32) -> (i32, i32) {
    %c0_i32 = arith.constant 0 : i32
    %c0_i32_0 = arith.constant 0 : i32
    %c0_i32_1 = arith.constant 0 : i32
    return %c0_i32, %c0_i32_0 : i32, i32
  }
  func.func @transform_3(%arg0: i32, %arg1: i32) -> (i32, i32) {
    %c0_i32 = arith.constant 0 : i32
    %c0_i32_0 = arith.constant 0 : i32
    %c0_i32_1 = arith.constant 0 : i32
    return %c0_i32, %c0_i32_0 : i32, i32
  }
  func.func @transform_4(%arg0: i32, %arg1: i32) -> (i32, i32) {
    %c0_i32 = arith.constant 0 : i32
    %c0_i32_0 = arith.constant 0 : i32
    %c0_i32_1 = arith.constant 0 : i32
    return %c0_i32, %c0_i32_0 : i32, i32
  }
  func.func @transform_5(%arg0: i32, %arg1: i32) -> (i32, i32) {
    %c0_i32 = arith.constant 0 : i32
    %c0_i32_0 = arith.constant 0 : i32
    %c0_i32_1 = arith.constant 0 : i32
    return %c0_i32, %c0_i32_0 : i32, i32
  }
  func.func @transform_6(%arg0: i32, %arg1: i32) -> (i32, i32) {
    %c0_i32 = arith.constant 0 : i32
    %c0_i32_0 = arith.constant 0 : i32
    return %arg0, %c0_i32 : i32, i32
  }
}

</mosaic_0001>

<llo_original>
// kernel: tpu_custom_call.1
$region0: #{tpu_custom_call.1}
  #allocation0 [shape = 'u32[]', space=smem, size = 0x4, offset = 0x4, fixed_abs, tag = 'smem constant byte address 0x4 - core index']
  #allocation1 [shape = 'u32[72,128]{1,0:T(1,128)}', space=vmem, size = 0x9000, scoped, tag = 'internal scratch']
  #allocation2 [shape = 'f32[8,8,128]{2,1,0:T(8,128)}', space=vmem, size = 0x8000, scoped, tag = 'scratch operand']
  #allocation3 [shape = 'f32[8,128]{1,0:T(8,128)}', space=vmem, size = 0x1000, scoped, tag = 'scratch operand']
  %s0 = inlined_call_operand.hbm [shape: f32[8,8,128], index: 0, kind: input, shape index: {}]
  %s1 = inlined_call_operand.hbm [shape: f32[128,128], index: 1, kind: input, shape index: {}]
  %s2 = inlined_call_operand.hbm [shape: f32[128,128], index: 2, kind: input, shape index: {}]
  %s3 = inlined_call_operand.vmem [shape: f32[1,128], index: 3, kind: input, shape index: {}]
  %s4 = inlined_call_operand.hbm [shape: f32[128,128], index: 4, kind: input, shape index: {}]
  %s5 = inlined_call_operand.vmem [shape: f32[1,128], index: 5, kind: input, shape index: {}]
  %s6 = inlined_call_operand.hbm [shape: f32[8,128], index: 6, kind: output, shape index: {}]
  %s7 = sld [smem:[#allocation0]]
  $region58: #{tpu_custom_call.1} parent=0
    _
  %s9 = ssub.s32 1, %s7
  %s10 = scalar_select 0, %s9, %s7
  $region1: #{tpu_custom_call.1} parent=0
    #allocation4 [shape = 'u8[32768]{0}', space=vmem, size = 0x8000, scoped, tag = 'input window, operand 0, single buffered']
    #allocation5 [shape = 's32[1]{0}', space=sflag, size = 0x4, scoped, tag = 'scoped memory for tpu_custom_call.1']
    #allocation6 [shape = 's32[1]{0}', space=sflag, size = 0x4, scoped, tag = 'scoped memory for tpu_custom_call.1']
    #allocation7 [shape = 'u8[65536]{0}', space=vmem, size = 0x10000, scoped, tag = 'input window, operand 1, single buffered']
    #allocation8 [shape = 's32[1]{0}', space=sflag, size = 0x4, scoped, tag = 'scoped memory for tpu_custom_call.1']
    #allocation9 [shape = 'u8[65536]{0}', space=vmem, size = 0x10000, scoped, tag = 'input window, operand 2, single buffered']
    #allocation10 [shape = 'u8[65536]{0}', space=vmem, size = 0x10000, scoped, tag = 'input window, operand 4, single buffered']
    #allocation11 [shape = 's32[1]{0}', space=sflag, size = 0x4, scoped, tag = 'scoped memory for tpu_custom_call.1']
    #allocation12 [shape = 'u8[4096]{0}', space=vmem, size = 0x1000, scoped, tag = 'output window, operand 0, single buffered']
    %11 = vsyncpa [#allocation5], 0
    %12 = vsyncpa [#allocation8], 0
    %13 = vsyncpa [#allocation11], 0
    %14 = vsyncpa [#allocation6], 0
    // Predicated region
    $region2: #{tpu_custom_call.1} parent=1 // pred_check
      _
    $region3: #{tpu_custom_call.1} parent=1 // pred_check_branch
      %16 = sbr.rel (0) target = $region5
    $region4: #{tpu_custom_call.1} parent=1 // pred_region
      %18 = vsyncadd [#allocation5], 0
      %s19 = sshll.u32 %s0, 4
      %s20 = int_to_ptr.hbm [resolvable:$true] %s19
      %s21 = sshll.u32 [#allocation4], 4
      %s22 = int_to_ptr.vmem [resolvable:$true] %s21
      %27 = dma.hbm_to_vmem [thread:$0]  %s20, 1024, %s22, [#allocation5], 128, 128, 8
    $region5: #{tpu_custom_call.1} parent=1 // pred_fallthru
      _
    // Predicated region
    $region6: #{tpu_custom_call.1} parent=1 // pred_check
      _
    $region7: #{tpu_custom_call.1} parent=1 // pred_check_branch
      %29 = sbr.rel (0) target = $region9
    $region8: #{tpu_custom_call.1} parent=1 // pred_region
      %31 = vsyncadd [#allocation8], 0
      %s32 = sshll.u32 %s1, 4
      %s33 = int_to_ptr.hbm [resolvable:$true] %s32
      %s34 = sshll.u32 [#allocation7], 4
      %s35 = int_to_ptr.vmem [resolvable:$true] %s34
      %40 = dma.hbm_to_vmem [thread:$0]  %s33, 2048, %s35, [#allocation8], 128, 128, 8
    $region9: #{tpu_custom_call.1} parent=1 // pred_fallthru
      _
    // Predicated region
    $region10: #{tpu_custom_call.1} parent=1 // pred_check
      _
    $region11: #{tpu_custom_call.1} parent=1 // pred_check_branch
      %42 = sbr.rel (0) target = $region13
    $region12: #{tpu_custom_call.1} parent=1 // pred_region
      %44 = vsyncadd [#allocation8], 0
      %s45 = sshll.u32 %s2, 4
      %s46 = int_to_ptr.hbm [resolvable:$true] %s45
      %s47 = sshll.u32 [#allocation9], 4
      %s48 = int_to_ptr.vmem [resolvable:$true] %s47
      %53 = dma.hbm_to_vmem [thread:$0]  %s46, 2048, %s48, [#allocation8], 128, 128, 8
    $region13: #{tpu_custom_call.1} parent=1 // pred_fallthru
      _
    // Predicated region
    $region14: #{tpu_custom_call.1} parent=1 // pred_check
      _
    $region15: #{tpu_custom_call.1} parent=1 // pred_check_branch
      %55 = sbr.rel (0) target = $region17
    $region16: #{tpu_custom_call.1} parent=1 // pred_region
      _
    $region17: #{tpu_custom_call.1} parent=1 // pred_fallthru
      _
    // Predicated region
    $region18: #{tpu_custom_call.1} parent=1 // pred_check
      _
    $region19: #{tpu_custom_call.1} parent=1 // pred_check_branch
      %57 = sbr.rel (0) target = $region21
    $region20: #{tpu_custom_call.1} parent=1 // pred_region
      %59 = vsyncadd [#allocation11], 0
      %s60 = sshll.u32 %s4, 4
      %s61 = int_to_ptr.hbm [resolvable:$true] %s60
      %s62 = sshll.u32 [#allocation10], 4
      %s63 = int_to_ptr.vmem [resolvable:$true] %s62
      %68 = dma.hbm_to_vmem [thread:$0]  %s61, 2048, %s63, [#allocation11], 128, 128, 8
    $region21: #{tpu_custom_call.1} parent=1 // pred_fallthru
      _
    // Predicated region
    $region22: #{tpu_custom_call.1} parent=1 // pred_check
      _
    $region23: #{tpu_custom_call.1} parent=1 // pred_check_branch
      %70 = sbr.rel (0) target = $region25
    $region24: #{tpu_custom_call.1} parent=1 // pred_region
      _
    $region25: #{tpu_custom_call.1} parent=1 // pred_fallthru
      _
    // Predicated region
    $region26: #{tpu_custom_call.1} parent=1 // pred_check
      _
    $region27: #{tpu_custom_call.1} parent=1 // pred_check_branch
      %72 = sbr.rel (0) target = $region29
    $region28: #{tpu_custom_call.1} parent=1 // pred_region
      %74 = dma.done [#allocation5], 1024
    $region29: #{tpu_custom_call.1} parent=1 // pred_fallthru
      _
    // Predicated region
    $region30: #{tpu_custom_call.1} parent=1 // pred_check
      _
    $region31: #{tpu_custom_call.1} parent=1 // pred_check_branch
      %76 = sbr.rel (0) target = $region33
    $region32: #{tpu_custom_call.1} parent=1 // pred_region
      %78 = dma.done [#allocation8], 2048
    $region33: #{tpu_custom_call.1} parent=1 // pred_fallthru
      _
    // Predicated region
    $region34: #{tpu_custom_call.1} parent=1 // pred_check
      _
    $region35: #{tpu_custom_call.1} parent=1 // pred_check_branch
      %80 = sbr.rel (0) target = $region37
    $region36: #{tpu_custom_call.1} parent=1 // pred_region
      %82 = dma.done [#allocation8], 2048
    $region37: #{tpu_custom_call.1} parent=1 // pred_fallthru
      _
    // Predicated region
    $region38: #{tpu_custom_call.1} parent=1 // pred_check
      _
    $region39: #{tpu_custom_call.1} parent=1 // pred_check_branch
      %84 = sbr.rel (0) target = $region41
    $region40: #{tpu_custom_call.1} parent=1 // pred_region
      %86 = dma.done [#allocation11], 2048
    $region41: #{tpu_custom_call.1} parent=1 // pred_fallthru
      _
    %p87 = scmp.eq.s32.totalorder 0, 0
    // Predicated region
    $region42: #{tpu_custom_call.1} parent=1 // pred_check
      %p88 = pneg %p87
    $region43: #{tpu_custom_call.1} parent=1 // pred_check_branch
      %90 = sbr.rel (%p88) target = $region45
    $region44: #{tpu_custom_call.1} parent=1 // pred_region
      %91 = vst [vmem:[#allocation3] sm:$0xff] 0.0
    $region45: #{tpu_custom_call.1} parent=1 // pred_fallthru
      _
    %v92 = vld [vmem:[#allocation4] sm:$0xff]
    %v93 = vld [vmem:[#allocation4 + $0x8] sm:$0xff]
    %v94 = vld [vmem:[#allocation4 + $0x10] sm:$0xff]
    %v95 = vld [vmem:[#allocation4 + $0x18] sm:$0xff]
    %v96 = vld [vmem:[#allocation4 + $0x20] sm:$0xff]
    %v97 = vld [vmem:[#allocation4 + $0x28] sm:$0xff]
    %v98 = vld [vmem:[#allocation4 + $0x30] sm:$0xff]
    %v99 = vld [vmem:[#allocation4 + $0x38] sm:$0xff]
    %v100 = vld [vmem:[#allocation7] sm:$0xff]
    %v101 = vld [vmem:[#allocation7 + $0x8] sm:$0xff]
    %v102 = vld [vmem:[#allocation7 + $0x10] sm:$0xff]
    %v103 = vld [vmem:[#allocation7 + $0x18] sm:$0xff]
    %v104 = vld [vmem:[#allocation7 + $0x20] sm:$0xff]
    %v105 = vld [vmem:[#allocation7 + $0x28] sm:$0xff]
    %v106 = vld [vmem:[#allocation7 + $0x30] sm:$0xff]
    %v107 = vld [vmem:[#allocation7 + $0x38] sm:$0xff]
    %v108 = vld [vmem:[#allocation7 + $0x40] sm:$0xff]
    %v109 = vld [vmem:[#allocation7 + $0x48] sm:$0xff]
    %v110 = vld [vmem:[#allocation7 + $0x50] sm:$0xff]
    %v111 = vld [vmem:[#allocation7 + $0x58] sm:$0xff]
    %v112 = vld [vmem:[#allocation7 + $0x60] sm:$0xff]
    %v113 = vld [vmem:[#allocation7 + $0x68] sm:$0xff]
    %v114 = vld [vmem:[#allocation7 + $0x70] sm:$0xff]
    %v115 = vld [vmem:[#allocation7 + $0x78] sm:$0xff]
    %v116 = vld [vmem:[%s3] sm:$0x1]
    %v118 = vperm.slane %v116, 0
    %120 = vmatpush.msra.mxu0 %v115
    %121 = vmatpush.msra.mxu0 %v114
    %122 = vmatpush.msra.mxu0 %v113
    %123 = vmatpush.msra.mxu0 %v112
    %124 = vmatpush.msra.mxu0 %v111
    %125 = vmatpush.msra.mxu0 %v110
    %126 = vmatpush.msra.mxu0 %v109
    %127 = vmatpush.msra.mxu0 %v108
    %128 = vmatpush.msra.mxu0 %v107
    %129 = vmatpush.msra.mxu0 %v106
    %130 = vmatpush.msra.mxu0 %v105
    %131 = vmatpush.msra.mxu0 %v104
    %132 = vmatpush.msra.mxu0 %v103
    %133 = vmatpush.msra.mxu0 %v102
    %134 = vmatpush.msra.mxu0 %v101
    %135 = vmatpush.msra.mxu0 %v100
    %136 = vmatmul.f32.gmra.mxu0 %v92
    %v137 = vpop.f32.mrf.mxu0
    %v138 = vadd.f32 %v118, %v137
    %139 = vmatmul.f32.gmra.mxu0 %v93
    %v140 = vpop.f32.mrf.mxu0
    %v141 = vadd.f32 %v118, %v140
    %142 = vmatmul.f32.gmra.mxu0 %v94
    %v143 = vpop.f32.mrf.mxu0
    %v144 = vadd.f32 %v118, %v143
    %145 = vmatmul.f32.gmra.mxu0 %v95
    %v146 = vpop.f32.mrf.mxu0
    %v147 = vadd.f32 %v118, %v146
    %148 = vmatmul.f32.gmra.mxu0 %v96
    %v149 = vpop.f32.mrf.mxu0
    %v150 = vadd.f32 %v118, %v149
    %151 = vmatmul.f32.gmra.mxu0 %v97
    %v152 = vpop.f32.mrf.mxu0
    %v153 = vadd.f32 %v118, %v152
    %154 = vmatmul.f32.gmra.mxu0 %v98
    %v155 = vpop.f32.mrf.mxu0
    %v156 = vadd.f32 %v118, %v155
    %157 = vmatmul.f32.gmra.mxu0 %v99
    %v158 = vpop.f32.mrf.mxu0
    %v159 = vadd.f32 %v118, %v158
    %160 = vdwg.mxu0
    %161 = vst [vmem:[#allocation2] sm:$0xff] %v138
    %162 = vst [vmem:[#allocation2 + $0x8] sm:$0xff] %v141
    %163 = vst [vmem:[#allocation2 + $0x10] sm:$0xff] %v144
    %164 = vst [vmem:[#allocation2 + $0x18] sm:$0xff] %v147
    %165 = vst [vmem:[#allocation2 + $0x20] sm:$0xff] %v150
    %166 = vst [vmem:[#allocation2 + $0x28] sm:$0xff] %v153
    %167 = vst [vmem:[#allocation2 + $0x30] sm:$0xff] %v156
    %168 = vst [vmem:[#allocation2 + $0x38] sm:$0xff] %v159
    %v169 = vld [vmem:[#allocation9] sm:$0xff]
    %v170 = vld [vmem:[#allocation9 + $0x8] sm:$0xff]
    %v171 = vld [vmem:[#allocation9 + $0x10] sm:$0xff]
    %v172 = vld [vmem:[#allocation9 + $0x18] sm:$0xff]
    %v173 = vld [vmem:[#allocation9 + $0x20] sm:$0xff]
    %v174 = vld [vmem:[#allocation9 + $0x28] sm:$0xff]
    %v175 = vld [vmem:[#allocation9 + $0x30] sm:$0xff]
    %v176 = vld [vmem:[#allocation9 + $0x38] sm:$0xff]
    %v177 = vld [vmem:[#allocation9 + $0x40] sm:$0xff]
    %v178 = vld [vmem:[#allocation9 + $0x48] sm:$0xff]
    %v179 = vld [vmem:[#allocation9 + $0x50] sm:$0xff]
    %v180 = vld [vmem:[#allocation9 + $0x58] sm:$0xff]
    %v181 = vld [vmem:[#allocation9 + $0x60] sm:$0xff]
    %v182 = vld [vmem:[#allocation9 + $0x68] sm:$0xff]
    %v183 = vld [vmem:[#allocation9 + $0x70] sm:$0xff]
    %v184 = vld [vmem:[#allocation9 + $0x78] sm:$0xff]
    %v185 = vld [vmem:[#allocation3] sm:$0xff]
    %v186 = vld [vmem:[#allocation2] sm:$0xff]
    %187 = vmatpush.msra.mxu0 %v184
    %188 = vmatpush.msra.mxu0 %v183
    %189 = vmatpush.msra.mxu0 %v182
    %190 = vmatpush.msra.mxu0 %v181
    %191 = vmatpush.msra.mxu0 %v180
    %192 = vmatpush.msra.mxu0 %v179
    %193 = vmatpush.msra.mxu0 %v178
    %194 = vmatpush.msra.mxu0 %v177
    %195 = vmatpush.msra.mxu0 %v176
    %196 = vmatpush.msra.mxu0 %v175
    %197 = vmatpush.msra.mxu0 %v174
    %198 = vmatpush.msra.mxu0 %v173
    %199 = vmatpush.msra.mxu0 %v172
    %200 = vmatpush.msra.mxu0 %v171
    %201 = vmatpush.msra.mxu0 %v170
    %202 = vmatpush.msra.mxu0 %v169
    %203 = vmatmul.f32.gmra.mxu0 %v185
    %v204 = vpop.f32.mrf.mxu0
    %v205 = vadd.f32 0.0, %v204
    %206 = vdwg.mxu0
    %v207 = vadd.f32 %v186, %v205
    %v208 = vtanh.pop %v207
    %s209 = scalar_lea.vmem [#allocation2], 8
    %v210 = vld [vmem:[%s209] sm:$0xff]
    %211 = vmatpush.msra.mxu0 %v184
    %212 = vmatpush.msra.mxu0 %v183
    %213 = vmatpush.msra.mxu0 %v182
    %214 = vmatpush.msra.mxu0 %v181
    %215 = vmatpush.msra.mxu0 %v180
    %216 = vmatpush.msra.mxu0 %v179
    %217 = vmatpush.msra.mxu0 %v178
    %218 = vmatpush.msra.mxu0 %v177
    %219 = vmatpush.msra.mxu0 %v176
    %220 = vmatpush.msra.mxu0 %v175
    %221 = vmatpush.msra.mxu0 %v174
    %222 = vmatpush.msra.mxu0 %v173
    %223 = vmatpush.msra.mxu0 %v172
    %224 = vmatpush.msra.mxu0 %v171
    %225 = vmatpush.msra.mxu0 %v170
    %226 = vmatpush.msra.mxu0 %v169
    %227 = vmatmul.f32.gmra.mxu0 %v208
    %v228 = vpop.f32.mrf.mxu0
    %v229 = vadd.f32 0.0, %v228
    %230 = vdwg.mxu0
    %v231 = vadd.f32 %v210, %v229
    %v232 = vtanh.pop %v231
    %s233 = scalar_lea.vmem [#allocation2], 16
    %v234 = vld [vmem:[%s233] sm:$0xff]
    %235 = vmatpush.msra.mxu0 %v184
    %236 = vmatpush.msra.mxu0 %v183
    %237 = vmatpush.msra.mxu0 %v182
    %238 = vmatpush.msra.mxu0 %v181
    %239 = vmatpush.msra.mxu0 %v180
    %240 = vmatpush.msra.mxu0 %v179
    %241 = vmatpush.msra.mxu0 %v178
    %242 = vmatpush.msra.mxu0 %v177
    %243 = vmatpush.msra.mxu0 %v176
    %244 = vmatpush.msra.mxu0 %v175
    %245 = vmatpush.msra.mxu0 %v174
    %246 = vmatpush.msra.mxu0 %v173
    %247 = vmatpush.msra.mxu0 %v172
    %248 = vmatpush.msra.mxu0 %v171
    %249 = vmatpush.msra.mxu0 %v170
    %250 = vmatpush.msra.mxu0 %v169
    %251 = vmatmul.f32.gmra.mxu0 %v232
    %v252 = vpop.f32.mrf.mxu0
    %v253 = vadd.f32 0.0, %v252
    %254 = vdwg.mxu0
    %v255 = vadd.f32 %v234, %v253
    %v256 = vtanh.pop %v255
    %s257 = scalar_lea.vmem [#allocation2], 24
    %v258 = vld [vmem:[%s257] sm:$0xff]
    %259 = vmatpush.msra.mxu0 %v184
    %260 = vmatpush.msra.mxu0 %v183
    %261 = vmatpush.msra.mxu0 %v182
    %262 = vmatpush.msra.mxu0 %v181
    %263 = vmatpush.msra.mxu0 %v180
    %264 = vmatpush.msra.mxu0 %v179
    %265 = vmatpush.msra.mxu0 %v178
    %266 = vmatpush.msra.mxu0 %v177
    %267 = vmatpush.msra.mxu0 %v176
    %268 = vmatpush.msra.mxu0 %v175
    %269 = vmatpush.msra.mxu0 %v174
    %270 = vmatpush.msra.mxu0 %v173
    %271 = vmatpush.msra.mxu0 %v172
    %272 = vmatpush.msra.mxu0 %v171
    %273 = vmatpush.msra.mxu0 %v170
    %274 = vmatpush.msra.mxu0 %v169
    %275 = vmatmul.f32.gmra.mxu0 %v256
    %v276 = vpop.f32.mrf.mxu0
    %v277 = vadd.f32 0.0, %v276
    %278 = vdwg.mxu0
    %v279 = vadd.f32 %v258, %v277
    %v280 = vtanh.pop %v279
    %s281 = scalar_lea.vmem [#allocation2], 32
    %v282 = vld [vmem:[%s281] sm:$0xff]
    %283 = vmatpush.msra.mxu0 %v184
    %284 = vmatpush.msra.mxu0 %v183
    %285 = vmatpush.msra.mxu0 %v182
    %286 = vmatpush.msra.mxu0 %v181
    %287 = vmatpush.msra.mxu0 %v180
    %288 = vmatpush.msra.mxu0 %v179
    %289 = vmatpush.msra.mxu0 %v178
    %290 = vmatpush.msra.mxu0 %v177
    %291 = vmatpush.msra.mxu0 %v176
    %292 = vmatpush.msra.mxu0 %v175
    %293 = vmatpush.msra.mxu0 %v174
    %294 = vmatpush.msra.mxu0 %v173
    %295 = vmatpush.msra.mxu0 %v172
    %296 = vmatpush.msra.mxu0 %v171
    %297 = vmatpush.msra.mxu0 %v170
    %298 = vmatpush.msra.mxu0 %v169
    %299 = vmatmul.f32.gmra.mxu0 %v280
    %v300 = vpop.f32.mrf.mxu0
    %v301 = vadd.f32 0.0, %v300
    %302 = vdwg.mxu0
    %v303 = vadd.f32 %v282, %v301
    %v304 = vtanh.pop %v303
    %s305 = scalar_lea.vmem [#allocation2], 40
    %v306 = vld [vmem:[%s305] sm:$0xff]
    %307 = vmatpush.msra.mxu0 %v184
    %308 = vmatpush.msra.mxu0 %v183
    %309 = vmatpush.msra.mxu0 %v182
    %310 = vmatpush.msra.mxu0 %v181
    %311 = vmatpush.msra.mxu0 %v180
    %312 = vmatpush.msra.mxu0 %v179
    %313 = vmatpush.msra.mxu0 %v178
    %314 = vmatpush.msra.mxu0 %v177
    %315 = vmatpush.msra.mxu0 %v176
    %316 = vmatpush.msra.mxu0 %v175
    %317 = vmatpush.msra.mxu0 %v174
    %318 = vmatpush.msra.mxu0 %v173
    %319 = vmatpush.msra.mxu0 %v172
    %320 = vmatpush.msra.mxu0 %v171
    %321 = vmatpush.msra.mxu0 %v170
    %322 = vmatpush.msra.mxu0 %v169
    %323 = vmatmul.f32.gmra.mxu0 %v304
    %v324 = vpop.f32.mrf.mxu0
    %v325 = vadd.f32 0.0, %v324
    %326 = vdwg.mxu0
    %v327 = vadd.f32 %v306, %v325
    %v328 = vtanh.pop %v327
    %s329 = scalar_lea.vmem [#allocation2], 48
    %v330 = vld [vmem:[%s329] sm:$0xff]
    %331 = vmatpush.msra.mxu0 %v184
    %332 = vmatpush.msra.mxu0 %v183
    %333 = vmatpush.msra.mxu0 %v182
    %334 = vmatpush.msra.mxu0 %v181
    %335 = vmatpush.msra.mxu0 %v180
    %336 = vmatpush.msra.mxu0 %v179
    %337 = vmatpush.msra.mxu0 %v178
    %338 = vmatpush.msra.mxu0 %v177
    %339 = vmatpush.msra.mxu0 %v176
    %340 = vmatpush.msra.mxu0 %v175
    %341 = vmatpush.msra.mxu0 %v174
    %342 = vmatpush.msra.mxu0 %v173
    %343 = vmatpush.msra.mxu0 %v172
    %344 = vmatpush.msra.mxu0 %v171
    %345 = vmatpush.msra.mxu0 %v170
    %346 = vmatpush.msra.mxu0 %v169
    %347 = vmatmul.f32.gmra.mxu0 %v328
    %v348 = vpop.f32.mrf.mxu0
    %v349 = vadd.f32 0.0, %v348
    %350 = vdwg.mxu0
    %v351 = vadd.f32 %v330, %v349
    %v352 = vtanh.pop %v351
    %s353 = scalar_lea.vmem [#allocation2], 56
    %v354 = vld [vmem:[%s353] sm:$0xff]
    %355 = vmatpush.msra.mxu0 %v184
    %356 = vmatpush.msra.mxu0 %v183
    %357 = vmatpush.msra.mxu0 %v182
    %358 = vmatpush.msra.mxu0 %v181
    %359 = vmatpush.msra.mxu0 %v180
    %360 = vmatpush.msra.mxu0 %v179
    %361 = vmatpush.msra.mxu0 %v178
    %362 = vmatpush.msra.mxu0 %v177
    %363 = vmatpush.msra.mxu0 %v176
    %364 = vmatpush.msra.mxu0 %v175
    %365 = vmatpush.msra.mxu0 %v174
    %366 = vmatpush.msra.mxu0 %v173
    %367 = vmatpush.msra.mxu0 %v172
    %368 = vmatpush.msra.mxu0 %v171
    %369 = vmatpush.msra.mxu0 %v170
    %370 = vmatpush.msra.mxu0 %v169
    %371 = vmatmul.f32.gmra.mxu0 %v352
    %v372 = vpop.f32.mrf.mxu0
    %v373 = vadd.f32 0.0, %v372
    %374 = vdwg.mxu0
    %v375 = vadd.f32 %v354, %v373
    %v376 = vtanh.pop %v375
    %377 = vst [vmem:[#allocation3] sm:$0xff] %v376
    // Predicated region
    $region46: #{tpu_custom_call.1} parent=1 // pred_check
      %p378 = pneg %p87
    $region47: #{tpu_custom_call.1} parent=1 // pred_check_branch
      %380 = sbr.rel (%p378) target = $region49
    $region48: #{tpu_custom_call.1} parent=1 // pred_region
      %v381 = vld [vmem:[#allocation3] sm:$0xff]
      %v382 = vld [vmem:[#allocation10] sm:$0xff]
      %v383 = vld [vmem:[#allocation10 + $0x8] sm:$0xff]
      %v384 = vld [vmem:[#allocation10 + $0x10] sm:$0xff]
      %v385 = vld [vmem:[#allocation10 + $0x18] sm:$0xff]
      %v386 = vld [vmem:[#allocation10 + $0x20] sm:$0xff]
      %v387 = vld [vmem:[#allocation10 + $0x28] sm:$0xff]
      %v388 = vld [vmem:[#allocation10 + $0x30] sm:$0xff]
      %v389 = vld [vmem:[#allocation10 + $0x38] sm:$0xff]
      %v390 = vld [vmem:[#allocation10 + $0x40] sm:$0xff]
      %v391 = vld [vmem:[#allocation10 + $0x48] sm:$0xff]
      %v392 = vld [vmem:[#allocation10 + $0x50] sm:$0xff]
      %v393 = vld [vmem:[#allocation10 + $0x58] sm:$0xff]
      %v394 = vld [vmem:[#allocation10 + $0x60] sm:$0xff]
      %v395 = vld [vmem:[#allocation10 + $0x68] sm:$0xff]
      %v396 = vld [vmem:[#allocation10 + $0x70] sm:$0xff]
      %v397 = vld [vmem:[#allocation10 + $0x78] sm:$0xff]
      %v398 = vld [vmem:[%s5] sm:$0x1]
      %v400 = vperm.slane %v398, 0
      %402 = vmatpush.msra.mxu0 %v397
      %403 = vmatpush.msra.mxu0 %v396
      %404 = vmatpush.msra.mxu0 %v395
      %405 = vmatpush.msra.mxu0 %v394
      %406 = vmatpush.msra.mxu0 %v393
      %407 = vmatpush.msra.mxu0 %v392
      %408 = vmatpush.msra.mxu0 %v391
      %409 = vmatpush.msra.mxu0 %v390
      %410 = vmatpush.msra.mxu0 %v389
      %411 = vmatpush.msra.mxu0 %v388
      %412 = vmatpush.msra.mxu0 %v387
      %413 = vmatpush.msra.mxu0 %v386
      %414 = vmatpush.msra.mxu0 %v385
      %415 = vmatpush.msra.mxu0 %v384
      %416 = vmatpush.msra.mxu0 %v383
      %417 = vmatpush.msra.mxu0 %v382
      %418 = vmatmul.f32.gmra.mxu0 %v381
      %v419 = vpop.f32.mrf.mxu0
      %v420 = vadd.f32 %v400, %v419
      %421 = vdwg.mxu0
      %422 = vst [vmem:[#allocation12] sm:$0xff] %v420
    $region49: #{tpu_custom_call.1} parent=1 // pred_fallthru
      _
    // Predicated region
    $region50: #{tpu_custom_call.1} parent=1 // pred_check
      _
    $region51: #{tpu_custom_call.1} parent=1 // pred_check_branch
      %424 = sbr.rel (0) target = $region53
    $region52: #{tpu_custom_call.1} parent=1 // pred_region
      %426 = vsyncadd [#allocation6], 0
      %s428 = sshll.u32 [#allocation12], 4
      %s429 = int_to_ptr.vmem [resolvable:$true] %s428
      %s430 = sshll.u32 %s6, 4
      %s431 = int_to_ptr.hbm [resolvable:$true] %s430
      %433 = dma.vmem_to_hbm [thread:$0]  %s429, 128, %s431, [#allocation6]
    $region53: #{tpu_custom_call.1} parent=1 // pred_fallthru
      _
    // Predicated region
    $region54: #{tpu_custom_call.1} parent=1 // pred_check
      _
    $region55: #{tpu_custom_call.1} parent=1 // pred_check_branch
      %435 = sbr.rel (0) target = $region57
    $region56: #{tpu_custom_call.1} parent=1 // pred_region
      %437 = dma.done [#allocation6], 128
    $region57: #{tpu_custom_call.1} parent=1 // pred_fallthru
      _
    %438 = vsyncpa [#allocation5], 1
    %439 = vsyncpa [#allocation8], 1
    %440 = vsyncpa [#allocation11], 1
    %441 = vsyncpa [#allocation6], 1

// kernel: tpu_custom_call.1
$region0: #{tpu_custom_call.1}
  #allocation0 [shape = 'u32[]', space=smem, size = 0x4, offset = 0x4, fixed_abs, tag = 'smem constant byte address 0x4 - core index']
  #allocation1 [shape = 'u32[72,128]{1,0:T(1,128)}', space=vmem, size = 0x9000, scoped, tag = 'internal scratch']
  #allocation2 [shape = 'f32[8,8,128]{2,1,0:T(8,128)}', space=vmem, size = 0x8000, scoped, tag = 'scratch operand']
  #allocation3 [shape = 'f32[8,128]{1,0:T(8,128)}', space=vmem, size = 0x1000, scoped, tag = 'scratch operand']
  %s0 = inlined_call_operand.hbm [shape: f32[8,8,128], index: 0, kind: input, shape index: {}]
  %s1 = inlined_call_operand.hbm [shape: f32[128,128], index: 1, kind: input, shape index: {}]
  %s2 = inlined_call_operand.hbm [shape: f32[128,128], index: 2, kind: input, shape index: {}]
  %s3 = inlined_call_operand.vmem [shape: f32[1,128], index: 3, kind: input, shape index: {}]
  %s4 = inlined_call_operand.hbm [shape: f32[128,128], index: 4, kind: input, shape index: {}]
  %s5 = inlined_call_operand.vmem [shape: f32[1,128], index: 5, kind: input, shape index: {}]
  %s6 = inlined_call_operand.hbm [shape: f32[8,128], index: 6, kind: output, shape index: {}]
  %s7 = sld [smem:[#allocation0]]
  $region58: #{tpu_custom_call.1} parent=0
    _
  %s9 = ssub.s32 1, %s7
  %s10 = scalar_select 0, %s9, %s7
  $region1: #{tpu_custom_call.1} parent=0
    #allocation4 [shape = 'u8[32768]{0}', space=vmem, size = 0x8000, scoped, tag = 'input window, operand 0, single buffered']
    #allocation5 [shape = 's32[1]{0}', space=sflag, size = 0x4, scoped, tag = 'scoped memory for tpu_custom_call.1']
    #allocation6 [shape = 's32[1]{0}', space=sflag, size = 0x4, scoped, tag = 'scoped memory for tpu_custom_call.1']
    #allocation7 [shape = 'u8[65536]{0}', space=vmem, size = 0x10000, scoped, tag = 'input window, operand 1, single buffered']
    #allocation8 [shape = 's32[1]{0}', space=sflag, size = 0x4, scoped, tag = 'scoped memory for tpu_custom_call.1']
    #allocation9 [shape = 'u8[65536]{0}', space=vmem, size = 0x10000, scoped, tag = 'input window, operand 2, single buffered']
    #allocation10 [shape = 'u8[65536]{0}', space=vmem, size = 0x10000, scoped, tag = 'input window, operand 4, single buffered']
    #allocation11 [shape = 's32[1]{0}', space=sflag, size = 0x4, scoped, tag = 'scoped memory for tpu_custom_call.1']
    #allocation12 [shape = 'u8[4096]{0}', space=vmem, size = 0x1000, scoped, tag = 'output window, operand 0, single buffered']
    %11 = vsyncpa [#allocation5], 0
    %12 = vsyncpa [#allocation8], 0
    %13 = vsyncpa [#allocation11], 0
    %14 = vsyncpa [#allocation6], 0
    // Predicated region
    $region2: #{tpu_custom_call.1} parent=1 // pred_check
      _
    $region3: #{tpu_custom_call.1} parent=1 // pred_check_branch
      %16 = sbr.rel (0) target = $region5
    $region4: #{tpu_custom_call.1} parent=1 // pred_region
      %18 = vsyncadd [#allocation5], 0
      %s19 = sshll.u32 %s0, 4
      %s20 = int_to_ptr.hbm [resolvable:$true] %s19
      %s21 = sshll.u32 [#allocation4], 4
      %s22 = int_to_ptr.vmem [resolvable:$true] %s21
      %27 = dma.hbm_to_vmem [thread:$0]  %s20, 1024, %s22, [#allocation5], 128, 128, 8
    $region5: #{tpu_custom_call.1} parent=1 // pred_fallthru
      _
    // Predicated region
    $region6: #{tpu_custom_call.1} parent=1 // pred_check
      _
    $region7: #{tpu_custom_call.1} parent=1 // pred_check_branch
      %29 = sbr.rel (0) target = $region9
    $region8: #{tpu_custom_call.1} parent=1 // pred_region
      %31 = vsyncadd [#allocation8], 0
      %s32 = sshll.u32 %s1, 4
      %s33 = int_to_ptr.hbm [resolvable:$true] %s32
      %s34 = sshll.u32 [#allocation7], 4
      %s35 = int_to_ptr.vmem [resolvable:$true] %s34
      %40 = dma.hbm_to_vmem [thread:$0]  %s33, 2048, %s35, [#allocation8], 128, 128, 8
    $region9: #{tpu_custom_call.1} parent=1 // pred_fallthru
      _
    // Predicated region
    $region10: #{tpu_custom_call.1} parent=1 // pred_check
      _
    $region11: #{tpu_custom_call.1} parent=1 // pred_check_branch
      %42 = sbr.rel (0) target = $region13
    $region12: #{tpu_custom_call.1} parent=1 // pred_region
      %44 = vsyncadd [#allocation8], 0
      %s45 = sshll.u32 %s2, 4
      %s46 = int_to_ptr.hbm [resolvable:$true] %s45
      %s47 = sshll.u32 [#allocation9], 4
      %s48 = int_to_ptr.vmem [resolvable:$true] %s47
      %53 = dma.hbm_to_vmem [thread:$0]  %s46, 2048, %s48, [#allocation8], 128, 128, 8
    $region13: #{tpu_custom_call.1} parent=1 // pred_fallthru
      _
    // Predicated region
    $region14: #{tpu_custom_call.1} parent=1 // pred_check
      _
    $region15: #{tpu_custom_call.1} parent=1 // pred_check_branch
      %55 = sbr.rel (0) target = $region17
    $region16: #{tpu_custom_call.1} parent=1 // pred_region
      _
    $region17: #{tpu_custom_call.1} parent=1 // pred_fallthru
      _
    // Predicated region
    $region18: #{tpu_custom_call.1} parent=1 // pred_check
      _
    $region19: #{tpu_custom_call.1} parent=1 // pred_check_branch
      %57 = sbr.rel (0) target = $region21
    $region20: #{tpu_custom_call.1} parent=1 // pred_region
      %59 = vsyncadd [#allocation11], 0
      %s60 = sshll.u32 %s4, 4
      %s61 = int_to_ptr.hbm [resolvable:$true] %s60
      %s62 = sshll.u32 [#allocation10], 4
      %s63 = int_to_ptr.vmem [resolvable:$true] %s62
      %68 = dma.hbm_to_vmem [thread:$0]  %s61, 2048, %s63, [#allocation11], 128, 128, 8
    $region21: #{tpu_custom_call.1} parent=1 // pred_fallthru
      _
    // Predicated region
    $region22: #{tpu_custom_call.1} parent=1 // pred_check
      _
    $region23: #{tpu_custom_call.1} parent=1 // pred_check_branch
      %70 = sbr.rel (0) target = $region25
    $region24: #{tpu_custom_call.1} parent=1 // pred_region
      _
    $region25: #{tpu_custom_call.1} parent=1 // pred_fallthru
      _
    // Predicated region
    $region26: #{tpu_custom_call.1} parent=1 // pred_check
      _
    $region27: #{tpu_custom_call.1} parent=1 // pred_check_branch
      %72 = sbr.rel (0) target = $region29
    $region28: #{tpu_custom_call.1} parent=1 // pred_region
      %74 = dma.done [#allocation5], 1024
    $region29: #{tpu_custom_call.1} parent=1 // pred_fallthru
      _
    // Predicated region
    $region30: #{tpu_custom_call.1} parent=1 // pred_check
      _
    $region31: #{tpu_custom_call.1} parent=1 // pred_check_branch
      %76 = sbr.rel (0) target = $region33
    $region32: #{tpu_custom_call.1} parent=1 // pred_region
      %78 = dma.done [#allocation8], 2048
    $region33: #{tpu_custom_call.1} parent=1 // pred_fallthru
      _
    // Predicated region
    $region34: #{tpu_custom_call.1} parent=1 // pred_check
      _
    $region35: #{tpu_custom_call.1} parent=1 // pred_check_branch
      %80 = sbr.rel (0) target = $region37
    $region36: #{tpu_custom_call.1} parent=1 // pred_region
      %82 = dma.done [#allocation8], 2048
    $region37: #{tpu_custom_call.1} parent=1 // pred_fallthru
      _
    // Predicated region
    $region38: #{tpu_custom_call.1} parent=1 // pred_check
      _
    $region39: #{tpu_custom_call.1} parent=1 // pred_check_branch
      %84 = sbr.rel (0) target = $region41
    $region40: #{tpu_custom_call.1} parent=1 // pred_region
      %86 = dma.done [#allocation11], 2048
    $region41: #{tpu_custom_call.1} parent=1 // pred_fallthru
      _
    %p87 = scmp.eq.s32.totalorder 0, 0
    // Predicated region
    $region42: #{tpu_custom_call.1} parent=1 // pred_check
      %p88 = pneg %p87
    $region43: #{tpu_custom_call.1} parent=1 // pred_check_branch
      %90 = sbr.rel (%p88) target = $region45
    $region44: #{tpu_custom_call.1} parent=1 // pred_region
      %91 = vst [vmem:[#allocation3] sm:$0xff] 0.0
    $region45: #{tpu_custom_call.1} parent=1 // pred_fallthru
      _
    %v92 = vld [vmem:[#allocation4] sm:$0xff]
    %v93 = vld [vmem:[#allocation4 + $0x8] sm:$0xff]
    %v94 = vld [vmem:[#allocation4 + $0x10] sm:$0xff]
    %v95 = vld [vmem:[#allocation4 + $0x18] sm:$0xff]
    %v96 = vld [vmem:[#allocation4 + $0x20] sm:$0xff]
    %v97 = vld [vmem:[#allocation4 + $0x28] sm:$0xff]
    %v98 = vld [vmem:[#allocation4 + $0x30] sm:$0xff]
    %v99 = vld [vmem:[#allocation4 + $0x38] sm:$0xff]
    %v100 = vld [vmem:[#allocation7] sm:$0xff]
    %v101 = vld [vmem:[#allocation7 + $0x8] sm:$0xff]
    %v102 = vld [vmem:[#allocation7 + $0x10] sm:$0xff]
    %v103 = vld [vmem:[#allocation7 + $0x18] sm:$0xff]
    %v104 = vld [vmem:[#allocation7 + $0x20] sm:$0xff]
    %v105 = vld [vmem:[#allocation7 + $0x28] sm:$0xff]
    %v106 = vld [vmem:[#allocation7 + $0x30] sm:$0xff]
    %v107 = vld [vmem:[#allocation7 + $0x38] sm:$0xff]
    %v108 = vld [vmem:[#allocation7 + $0x40] sm:$0xff]
    %v109 = vld [vmem:[#allocation7 + $0x48] sm:$0xff]
    %v110 = vld [vmem:[#allocation7 + $0x50] sm:$0xff]
    %v111 = vld [vmem:[#allocation7 + $0x58] sm:$0xff]
    %v112 = vld [vmem:[#allocation7 + $0x60] sm:$0xff]
    %v113 = vld [vmem:[#allocation7 + $0x68] sm:$0xff]
    %v114 = vld [vmem:[#allocation7 + $0x70] sm:$0xff]
    %v115 = vld [vmem:[#allocation7 + $0x78] sm:$0xff]
    %v116 = vld [vmem:[%s3] sm:$0x1]
    %v118 = vperm.slane %v116, 0
    %120 = vmatpush.msra.mxu0 %v115
    %121 = vmatpush.msra.mxu0 %v114
    %122 = vmatpush.msra.mxu0 %v113
    %123 = vmatpush.msra.mxu0 %v112
    %124 = vmatpush.msra.mxu0 %v111
    %125 = vmatpush.msra.mxu0 %v110
    %126 = vmatpush.msra.mxu0 %v109
    %127 = vmatpush.msra.mxu0 %v108
    %128 = vmatpush.msra.mxu0 %v107
    %129 = vmatpush.msra.mxu0 %v106
    %130 = vmatpush.msra.mxu0 %v105
    %131 = vmatpush.msra.mxu0 %v104
    %132 = vmatpush.msra.mxu0 %v103
    %133 = vmatpush.msra.mxu0 %v102
    %134 = vmatpush.msra.mxu0 %v101
    %135 = vmatpush.msra.mxu0 %v100
    %136 = vmatmul.f32.gmra.mxu0 %v92
    %v137 = vpop.f32.mrf.mxu0
    %v138 = vadd.f32 %v118, %v137
    %139 = vmatmul.f32.gmra.mxu0 %v93
    %v140 = vpop.f32.mrf.mxu0
    %v141 = vadd.f32 %v118, %v140
    %142 = vmatmul.f32.gmra.mxu0 %v94
    %v143 = vpop.f32.mrf.mxu0
    %v144 = vadd.f32 %v118, %v143
    %145 = vmatmul.f32.gmra.mxu0 %v95
    %v146 = vpop.f32.mrf.mxu0
    %v147 = vadd.f32 %v118, %v146
    %148 = vmatmul.f32.gmra.mxu0 %v96
    %v149 = vpop.f32.mrf.mxu0
    %v150 = vadd.f32 %v118, %v149
    %151 = vmatmul.f32.gmra.mxu0 %v97
    %v152 = vpop.f32.mrf.mxu0
    %v153 = vadd.f32 %v118, %v152
    %154 = vmatmul.f32.gmra.mxu0 %v98
    %v155 = vpop.f32.mrf.mxu0
    %v156 = vadd.f32 %v118, %v155
    %157 = vmatmul.f32.gmra.mxu0 %v99
    %v158 = vpop.f32.mrf.mxu0
    %v159 = vadd.f32 %v118, %v158
    %160 = vdwg.mxu0
    %161 = vst [vmem:[#allocation2] sm:$0xff] %v138
    %162 = vst [vmem:[#allocation2 + $0x8] sm:$0xff] %v141
    %163 = vst [vmem:[#allocation2 + $0x10] sm:$0xff] %v144
    %164 = vst [vmem:[#allocation2 + $0x18] sm:$0xff] %v147
    %165 = vst [vmem:[#allocation2 + $0x20] sm:$0xff] %v150
    %166 = vst [vmem:[#allocation2 + $0x28] sm:$0xff] %v153
    %167 = vst [vmem:[#allocation2 + $0x30] sm:$0xff] %v156
    %168 = vst [vmem:[#allocation2 + $0x38] sm:$0xff] %v159
    %v169 = vld [vmem:[#allocation9] sm:$0xff]
    %v170 = vld [vmem:[#allocation9 + $0x8] sm:$0xff]
    %v171 = vld [vmem:[#allocation9 + $0x10] sm:$0xff]
    %v172 = vld [vmem:[#allocation9 + $0x18] sm:$0xff]
    %v173 = vld [vmem:[#allocation9 + $0x20] sm:$0xff]
    %v174 = vld [vmem:[#allocation9 + $0x28] sm:$0xff]
    %v175 = vld [vmem:[#allocation9 + $0x30] sm:$0xff]
    %v176 = vld [vmem:[#allocation9 + $0x38] sm:$0xff]
    %v177 = vld [vmem:[#allocation9 + $0x40] sm:$0xff]
    %v178 = vld [vmem:[#allocation9 + $0x48] sm:$0xff]
    %v179 = vld [vmem:[#allocation9 + $0x50] sm:$0xff]
    %v180 = vld [vmem:[#allocation9 + $0x58] sm:$0xff]
    %v181 = vld [vmem:[#allocation9 + $0x60] sm:$0xff]
    %v182 = vld [vmem:[#allocation9 + $0x68] sm:$0xff]
    %v183 = vld [vmem:[#allocation9 + $0x70] sm:$0xff]
    %v184 = vld [vmem:[#allocation9 + $0x78] sm:$0xff]
    %v185 = vld [vmem:[#allocation3] sm:$0xff]
    %v186 = vld [vmem:[#allocation2] sm:$0xff]
    %187 = vmatpush.msra.mxu0 %v184
    %188 = vmatpush.msra.mxu0 %v183
    %189 = vmatpush.msra.mxu0 %v182
    %190 = vmatpush.msra.mxu0 %v181
    %191 = vmatpush.msra.mxu0 %v180
    %192 = vmatpush.msra.mxu0 %v179
    %193 = vmatpush.msra.mxu0 %v178
    %194 = vmatpush.msra.mxu0 %v177
    %195 = vmatpush.msra.mxu0 %v176
    %196 = vmatpush.msra.mxu0 %v175
    %197 = vmatpush.msra.mxu0 %v174
    %198 = vmatpush.msra.mxu0 %v173
    %199 = vmatpush.msra.mxu0 %v172
    %200 = vmatpush.msra.mxu0 %v171
    %201 = vmatpush.msra.mxu0 %v170
    %202 = vmatpush.msra.mxu0 %v169
    %203 = vmatmul.f32.gmra.mxu0 %v185
    %v204 = vpop.f32.mrf.mxu0
    %v205 = vadd.f32 0.0, %v204
    %206 = vdwg.mxu0
    %v207 = vadd.f32 %v186, %v205
    %v208 = vtanh.pop %v207
    %s209 = scalar_lea.vmem [#allocation2], 8
    %v210 = vld [vmem:[%s209] sm:$0xff]
    %211 = vmatpush.msra.mxu0 %v184
    %212 = vmatpush.msra.mxu0 %v183
    %213 = vmatpush.msra.mxu0 %v182
    %214 = vmatpush.msra.mxu0 %v181
    %215 = vmatpush.msra.mxu0 %v180
    %216 = vmatpush.msra.mxu0 %v179
    %217 = vmatpush.msra.mxu0 %v178
    %218 = vmatpush.msra.mxu0 %v177
    %219 = vmatpush.msra.mxu0 %v176
    %220 = vmatpush.msra.mxu0 %v175
    %221 = vmatpush.msra.mxu0 %v174
    %222 = vmatpush.msra.mxu0 %v173
    %223 = vmatpush.msra.mxu0 %v172
    %224 = vmatpush.msra.mxu0 %v171
    %225 = vmatpush.msra.mxu0 %v170
    %226 = vmatpush.msra.mxu0 %v169
    %227 = vmatmul.f32.gmra.mxu0 %v208
    %v228 = vpop.f32.mrf.mxu0
    %v229 = vadd.f32 0.0, %v228
    %230 = vdwg.mxu0
    %v231 = vadd.f32 %v210, %v229
    %v232 = vtanh.pop %v231
    %s233 = scalar_lea.vmem [#allocation2], 16
    %v234 = vld [vmem:[%s233] sm:$0xff]
    %235 = vmatpush.msra.mxu0 %v184
    %236 = vmatpush.msra.mxu0 %v183
    %237 = vmatpush.msra.mxu0 %v182
    %238 = vmatpush.msra.mxu0 %v181
    %239 = vmatpush.msra.mxu0 %v180
    %240 = vmatpush.msra.mxu0 %v179
    %241 = vmatpush.msra.mxu0 %v178
    %242 = vmatpush.msra.mxu0 %v177
    %243 = vmatpush.msra.mxu0 %v176
    %244 = vmatpush.msra.mxu0 %v175
    %245 = vmatpush.msra.mxu0 %v174
    %246 = vmatpush.msra.mxu0 %v173
    %247 = vmatpush.msra.mxu0 %v172
    %248 = vmatpush.msra.mxu0 %v171
    %249 = vmatpush.msra.mxu0 %v170
    %250 = vmatpush.msra.mxu0 %v169
    %251 = vmatmul.f32.gmra.mxu0 %v232
    %v252 = vpop.f32.mrf.mxu0
    %v253 = vadd.f32 0.0, %v252
    %254 = vdwg.mxu0
    %v255 = vadd.f32 %v234, %v253
    %v256 = vtanh.pop %v255
    %s257 = scalar_lea.vmem [#allocation2], 24
    %v258 = vld [vmem:[%s257] sm:$0xff]
    %259 = vmatpush.msra.mxu0 %v184
    %260 = vmatpush.msra.mxu0 %v183
    %261 = vmatpush.msra.mxu0 %v182
    %262 = vmatpush.msra.mxu0 %v181
    %263 = vmatpush.msra.mxu0 %v180
    %264 = vmatpush.msra.mxu0 %v179
    %265 = vmatpush.msra.mxu0 %v178
    %266 = vmatpush.msra.mxu0 %v177
    %267 = vmatpush.msra.mxu0 %v176
    %268 = vmatpush.msra.mxu0 %v175
    %269 = vmatpush.msra.mxu0 %v174
    %270 = vmatpush.msra.mxu0 %v173
    %271 = vmatpush.msra.mxu0 %v172
    %272 = vmatpush.msra.mxu0 %v171
    %273 = vmatpush.msra.mxu0 %v170
    %274 = vmatpush.msra.mxu0 %v169
    %275 = vmatmul.f32.gmra.mxu0 %v256
    %v276 = vpop.f32.mrf.mxu0
    %v277 = vadd.f32 0.0, %v276
    %278 = vdwg.mxu0
    %v279 = vadd.f32 %v258, %v277
    %v280 = vtanh.pop %v279
    %s281 = scalar_lea.vmem [#allocation2], 32
    %v282 = vld [vmem:[%s281] sm:$0xff]
    %283 = vmatpush.msra.mxu0 %v184
    %284 = vmatpush.msra.mxu0 %v183
    %285 = vmatpush.msra.mxu0 %v182
    %286 = vmatpush.msra.mxu0 %v181
    %287 = vmatpush.msra.mxu0 %v180
    %288 = vmatpush.msra.mxu0 %v179
    %289 = vmatpush.msra.mxu0 %v178
    %290 = vmatpush.msra.mxu0 %v177
    %291 = vmatpush.msra.mxu0 %v176
    %292 = vmatpush.msra.mxu0 %v175
    %293 = vmatpush.msra.mxu0 %v174
    %294 = vmatpush.msra.mxu0 %v173
    %295 = vmatpush.msra.mxu0 %v172
    %296 = vmatpush.msra.mxu0 %v171
    %297 = vmatpush.msra.mxu0 %v170
    %298 = vmatpush.msra.mxu0 %v169
    %299 = vmatmul.f32.gmra.mxu0 %v280
    %v300 = vpop.f32.mrf.mxu0
    %v301 = vadd.f32 0.0, %v300
    %302 = vdwg.mxu0
    %v303 = vadd.f32 %v282, %v301
    %v304 = vtanh.pop %v303
    %s305 = scalar_lea.vmem [#allocation2], 40
    %v306 = vld [vmem:[%s305] sm:$0xff]
    %307 = vmatpush.msra.mxu0 %v184
    %308 = vmatpush.msra.mxu0 %v183
    %309 = vmatpush.msra.mxu0 %v182
    %310 = vmatpush.msra.mxu0 %v181
    %311 = vmatpush.msra.mxu0 %v180
    %312 = vmatpush.msra.mxu0 %v179
    %313 = vmatpush.msra.mxu0 %v178
    %314 = vmatpush.msra.mxu0 %v177
    %315 = vmatpush.msra.mxu0 %v176
    %316 = vmatpush.msra.mxu0 %v175
    %317 = vmatpush.msra.mxu0 %v174
    %318 = vmatpush.msra.mxu0 %v173
    %319 = vmatpush.msra.mxu0 %v172
    %320 = vmatpush.msra.mxu0 %v171
    %321 = vmatpush.msra.mxu0 %v170
    %322 = vmatpush.msra.mxu0 %v169
    %323 = vmatmul.f32.gmra.mxu0 %v304
    %v324 = vpop.f32.mrf.mxu0
    %v325 = vadd.f32 0.0, %v324
    %326 = vdwg.mxu0
    %v327 = vadd.f32 %v306, %v325
    %v328 = vtanh.pop %v327
    %s329 = scalar_lea.vmem [#allocation2], 48
    %v330 = vld [vmem:[%s329] sm:$0xff]
    %331 = vmatpush.msra.mxu0 %v184
    %332 = vmatpush.msra.mxu0 %v183
    %333 = vmatpush.msra.mxu0 %v182
    %334 = vmatpush.msra.mxu0 %v181
    %335 = vmatpush.msra.mxu0 %v180
    %336 = vmatpush.msra.mxu0 %v179
    %337 = vmatpush.msra.mxu0 %v178
    %338 = vmatpush.msra.mxu0 %v177
    %339 = vmatpush.msra.mxu0 %v176
    %340 = vmatpush.msra.mxu0 %v175
    %341 = vmatpush.msra.mxu0 %v174
    %342 = vmatpush.msra.mxu0 %v173
    %343 = vmatpush.msra.mxu0 %v172
    %344 = vmatpush.msra.mxu0 %v171
    %345 = vmatpush.msra.mxu0 %v170
    %346 = vmatpush.msra.mxu0 %v169
    %347 = vmatmul.f32.gmra.mxu0 %v328
    %v348 = vpop.f32.mrf.mxu0
    %v349 = vadd.f32 0.0, %v348
    %350 = vdwg.mxu0
    %v351 = vadd.f32 %v330, %v349
    %v352 = vtanh.pop %v351
    %s353 = scalar_lea.vmem [#allocation2], 56
    %v354 = vld [vmem:[%s353] sm:$0xff]
    %355 = vmatpush.msra.mxu0 %v184
    %356 = vmatpush.msra.mxu0 %v183
    %357 = vmatpush.msra.mxu0 %v182
    %358 = vmatpush.msra.mxu0 %v181
    %359 = vmatpush.msra.mxu0 %v180
    %360 = vmatpush.msra.mxu0 %v179
    %361 = vmatpush.msra.mxu0 %v178
    %362 = vmatpush.msra.mxu0 %v177
    %363 = vmatpush.msra.mxu0 %v176
    %364 = vmatpush.msra.mxu0 %v175
    %365 = vmatpush.msra.mxu0 %v174
    %366 = vmatpush.msra.mxu0 %v173
    %367 = vmatpush.msra.mxu0 %v172
    %368 = vmatpush.msra.mxu0 %v171
    %369 = vmatpush.msra.mxu0 %v170
    %370 = vmatpush.msra.mxu0 %v169
    %371 = vmatmul.f32.gmra.mxu0 %v352
    %v372 = vpop.f32.mrf.mxu0
    %v373 = vadd.f32 0.0, %v372
    %374 = vdwg.mxu0
    %v375 = vadd.f32 %v354, %v373
    %v376 = vtanh.pop %v375
    %377 = vst [vmem:[#allocation3] sm:$0xff] %v376
    // Predicated region
    $region46: #{tpu_custom_call.1} parent=1 // pred_check
      %p378 = pneg %p87
    $region47: #{tpu_custom_call.1} parent=1 // pred_check_branch
      %380 = sbr.rel (%p378) target = $region49
    $region48: #{tpu_custom_call.1} parent=1 // pred_region
      %v381 = vld [vmem:[#allocation3] sm:$0xff]
      %v382 = vld [vmem:[#allocation10] sm:$0xff]
      %v383 = vld [vmem:[#allocation10 + $0x8] sm:$0xff]
      %v384 = vld [vmem:[#allocation10 + $0x10] sm:$0xff]
      %v385 = vld [vmem:[#allocation10 + $0x18] sm:$0xff]
      %v386 = vld [vmem:[#allocation10 + $0x20] sm:$0xff]
      %v387 = vld [vmem:[#allocation10 + $0x28] sm:$0xff]
      %v388 = vld [vmem:[#allocation10 + $0x30] sm:$0xff]
      %v389 = vld [vmem:[#allocation10 + $0x38] sm:$0xff]
      %v390 = vld [vmem:[#allocation10 + $0x40] sm:$0xff]
      %v391 = vld [vmem:[#allocation10 + $0x48] sm:$0xff]
      %v392 = vld [vmem:[#allocation10 + $0x50] sm:$0xff]
      %v393 = vld [vmem:[#allocation10 + $0x58] sm:$0xff]
      %v394 = vld [vmem:[#allocation10 + $0x60] sm:$0xff]
      %v395 = vld [vmem:[#allocation10 + $0x68] sm:$0xff]
      %v396 = vld [vmem:[#allocation10 + $0x70] sm:$0xff]
      %v397 = vld [vmem:[#allocation10 + $0x78] sm:$0xff]
      %v398 = vld [vmem:[%s5] sm:$0x1]
      %v400 = vperm.slane %v398, 0
      %402 = vmatpush.msra.mxu0 %v397
      %403 = vmatpush.msra.mxu0 %v396
      %404 = vmatpush.msra.mxu0 %v395
      %405 = vmatpush.msra.mxu0 %v394
      %406 = vmatpush.msra.mxu0 %v393
      %407 = vmatpush.msra.mxu0 %v392
      %408 = vmatpush.msra.mxu0 %v391
      %409 = vmatpush.msra.mxu0 %v390
      %410 = vmatpush.msra.mxu0 %v389
      %411 = vmatpush.msra.mxu0 %v388
      %412 = vmatpush.msra.mxu0 %v387
      %413 = vmatpush.msra.mxu0 %v386
      %414 = vmatpush.msra.mxu0 %v385
      %415 = vmatpush.msra.mxu0 %v384
      %416 = vmatpush.msra.mxu0 %v383
      %417 = vmatpush.msra.mxu0 %v382
      %418 = vmatmul.f32.gmra.mxu0 %v381
      %v419 = vpop.f32.mrf.mxu0
      %v420 = vadd.f32 %v400, %v419
      %421 = vdwg.mxu0
      %422 = vst [vmem:[#allocation12] sm:$0xff] %v420
    $region49: #{tpu_custom_call.1} parent=1 // pred_fallthru
      _
    // Predicated region
    $region50: #{tpu_custom_call.1} parent=1 // pred_check
      _
    $region51: #{tpu_custom_call.1} parent=1 // pred_check_branch
      %424 = sbr.rel (0) target = $region53
    $region52: #{tpu_custom_call.1} parent=1 // pred_region
      %426 = vsyncadd [#allocation6], 0
      %s428 = sshll.u32 [#allocation12], 4
      %s429 = int_to_ptr.vmem [resolvable:$true] %s428
      %s430 = sshll.u32 %s6, 4
      %s431 = int_to_ptr.hbm [resolvable:$true] %s430
      %433 = dma.vmem_to_hbm [thread:$0]  %s429, 128, %s431, [#allocation6]
    $region53: #{tpu_custom_call.1} parent=1 // pred_fallthru
      _
    // Predicated region
    $region54: #{tpu_custom_call.1} parent=1 // pred_check
      _
    $region55: #{tpu_custom_call.1} parent=1 // pred_check_branch
      %435 = sbr.rel (0) target = $region57
    $region56: #{tpu_custom_call.1} parent=1 // pred_region
      %437 = dma.done [#allocation6], 128
    $region57: #{tpu_custom_call.1} parent=1 // pred_fallthru
      _
    %438 = vsyncpa [#allocation5], 1
    %439 = vsyncpa [#allocation8], 1
    %440 = vsyncpa [#allocation11], 1
    %441 = vsyncpa [#allocation6], 1

</llo_original>
